<compile_context>
chip_gen: v5e
topology: v5e:2x2
jax: 0.10.0
libtpu: 0.0.40
codegen_flags: <defaults>
</compile_context>

<pallas_src>
import functools

import jax
import jax.numpy as jnp
from jax.experimental import pallas as pl
from jax.experimental.pallas import tpu as pltpu

# ---------------------------------------------------------------------------
# small synthetic configuration (real model: dim=256, heads=8, mlp=2048, ...)
# ---------------------------------------------------------------------------
EMBED_DIM = 32          # mla_channels / transformer embedding dim
NUM_HEADS = 4
MLP_DIM = 64
DEPTH = 2
DOWNSAMPLE_RATE = 2     # cross-attention internal dim = EMBED_DIM // 2
MLAHEAD_CHANNELS = 16
NUM_CLASSES = 2
TEXT_LEN = 8

_VMEM_LIMIT = 32 * 1024 * 1024   # explicit scoped-VMEM budget (safe on v5e/v6e/v7x)


def _pick_tile(d, pref, align):
    """Largest tile <= pref that divides d and respects `align`; full dim fallback."""
    if d <= pref:
        return d
    t = pref
    while t >= align:
        if d % t == 0:
            return t
        t //= 2
    return d            # full dim is always a legal block


# ---------------------------------------------------------------------------
# K-tiled matmul with f32 accumulator:  (M,K) @ (K,N) + bias [+ ReLU]
# ---------------------------------------------------------------------------
def _mm_kernel(a_ref, b_ref, bias_ref, o_ref, acc_ref, *, relu):
    @pl.when(pl.program_id(2) == 0)
    def _init():
        acc_ref[...] = jnp.zeros_like(acc_ref)

    acc_ref[...] += jnp.dot(a_ref[...], b_ref[...],
                            preferred_element_type=jnp.float32)

    @pl.when(pl.program_id(2) == pl.num_programs(2) - 1)
    def _finalize():
        y = acc_ref[...] + bias_ref[...]
        if relu:
            y = jnp.maximum(y, 0.0)
        o_ref[...] = y


def pallas_matmul(a, b, bias=None, relu=False, bias_axis="n"):
    """a:(M,K) @ b:(K,N) + bias.  Operands cast to bf16, f32 accumulation."""
    M, K = a.shape
    _, N = b.shape
    a = a.astype(jnp.bfloat16)
    b = b.astype(jnp.bfloat16)

    tm = _pick_tile(M, 256, 8)
    tn = _pick_tile(N, 512, 128)
    tk = _pick_tile(K, 1024, 128)

    if bias is None:
        bias2 = jnp.zeros((1, N), jnp.float32)
        bias_axis = "n"
    elif bias_axis == "n":
        bias2 = bias.reshape(1, N).astype(jnp.float32)
    else:
        bias2 = bias.reshape(M, 1).astype(jnp.float32)

    if bias_axis == "n":
        bias_spec = pl.BlockSpec((1, tn), lambda i, j, k: (0, j))
    else:
        bias_spec = pl.BlockSpec((tm, 1), lambda i, j, k: (i, 0))

    grid = (M // tm, N // tn, K // tk)
    return pl.pallas_call(
        functools.partial(_mm_kernel, relu=relu),
        out_shape=jax.ShapeDtypeStruct((M, N), jnp.float32),
        grid=grid,
        in_specs=[
            pl.BlockSpec((tm, tk), lambda i, j, k: (i, k)),
            pl.BlockSpec((tk, tn), lambda i, j, k: (k, j)),
            bias_spec,
        ],
        out_specs=pl.BlockSpec((tm, tn), lambda i, j, k: (i, j)),
        scratch_shapes=[pltpu.VMEM((tm, tn), jnp.float32)],
        compiler_params=pltpu.CompilerParams(
            dimension_semantics=("parallel", "parallel", "arbitrary"),
            vmem_limit_bytes=_VMEM_LIMIT),
    )(a, b, bias2)


# ---------------------------------------------------------------------------
# LayerNorm  /  fused residual-add + LayerNorm   (elementwise math kept in f32)
# ---------------------------------------------------------------------------
def _ln_kernel(x_ref, g_ref, b_ref, o_ref, *, eps):
    x = x_ref[...]
    mu = jnp.mean(x, axis=-1, keepdims=True)
    xc = x - mu
    var = jnp.mean(xc * xc, axis=-1, keepdims=True)
    o_ref[...] = xc * jax.lax.rsqrt(var + eps) * g_ref[...] + b_ref[...]


def _add_ln_kernel(x_ref, r_ref, g_ref, b_ref, o_ref, *, eps):
    x = x_ref[...] + r_ref[...]
    mu = jnp.mean(x, axis=-1, keepdims=True)
    xc = x - mu
    var = jnp.mean(xc * xc, axis=-1, keepdims=True)
    o_ref[...] = xc * jax.lax.rsqrt(var + eps) * g_ref[...] + b_ref[...]


def pallas_layernorm(x, gamma, beta, eps=1e-5):
    lead = x.shape[:-1]
    C = x.shape[-1]
    x2 = x.reshape(-1, C).astype(jnp.float32)
    M = x2.shape[0]
    tm = _pick_tile(M, 256, 8)
    out = pl.pallas_call(
        functools.partial(_ln_kernel, eps=eps),
        out_shape=jax.ShapeDtypeStruct((M, C), jnp.float32),
        grid=(M // tm,),
        in_specs=[pl.BlockSpec((tm, C), lambda i: (i, 0)),
                  pl.BlockSpec((1, C), lambda i: (0, 0)),
                  pl.BlockSpec((1, C), lambda i: (0, 0))],
        out_specs=pl.BlockSpec((tm, C), lambda i: (i, 0)),
        compiler_params=pltpu.CompilerParams(dimension_semantics=("parallel",)),
    )(x2, gamma.reshape(1, C).astype(jnp.float32),
      beta.reshape(1, C).astype(jnp.float32))
    return out.reshape(*lead, C)


def pallas_add_layernorm(x, res, gamma, beta, eps=1e-5):
    """LayerNorm(x + res)."""
    lead = x.shape[:-1]
    C = x.shape[-1]
    x2 = x.reshape(-1, C).astype(jnp.float32)
    r2 = res.reshape(-1, C).astype(jnp.float32)
    M = x2.shape[0]
    tm = _pick_tile(M, 256, 8)
    out = pl.pallas_call(
        functools.partial(_add_ln_kernel, eps=eps),
        out_shape=jax.ShapeDtypeStruct((M, C), jnp.float32),
        grid=(M // tm,),
        in_specs=[pl.BlockSpec((tm, C), lambda i: (i, 0)),
                  pl.BlockSpec((tm, C), lambda i: (i, 0)),
                  pl.BlockSpec((1, C), lambda i: (0, 0)),
                  pl.BlockSpec((1, C), lambda i: (0, 0))],
        out_specs=pl.BlockSpec((tm, C), lambda i: (i, 0)),
        compiler_params=pltpu.CompilerParams(dimension_semantics=("parallel",)),
    )(x2, r2, gamma.reshape(1, C).astype(jnp.float32),
      beta.reshape(1, C).astype(jnp.float32))
    return out.reshape(*lead, C)


# ---------------------------------------------------------------------------
# InstanceNorm3d (affine=False) + ReLU, lane-dense: rows = N*C, lanes = D*H*W
# ---------------------------------------------------------------------------
def _in_relu_kernel(x_ref, o_ref, *, eps):
    x = x_ref[...]
    mu = jnp.mean(x, axis=-1, keepdims=True)
    xc = x - mu
    var = jnp.mean(xc * xc, axis=-1, keepdims=True)
    o_ref[...] = jnp.maximum(xc * jax.lax.rsqrt(var + eps), 0.0)


def instance_norm_relu(x, eps=1e-5):
    N, C, D, H, W = x.shape
    R, S = N * C, D * H * W
    x2 = x.reshape(R, S).astype(jnp.float32)
    tr = 8 if R % 8 == 0 else R
    out = pl.pallas_call(
        functools.partial(_in_relu_kernel, eps=eps),
        out_shape=jax.ShapeDtypeStruct((R, S), jnp.float32),
        grid=(R // tr,),
        in_specs=[pl.BlockSpec((tr, S), lambda i: (i, 0))],
        out_specs=pl.BlockSpec((tr, S), lambda i: (i, 0)),
        compiler_params=pltpu.CompilerParams(dimension_semantics=("parallel",)),
    )(x2)
    return out.reshape(N, C, D, H, W)


# ---------------------------------------------------------------------------
# Fully fused attention: per-head QKV projection + softmax + PV + output proj
# ---------------------------------------------------------------------------
def _fused_attn_kernel(qs_ref, ks_ref, vs_ref, wq_ref, bq_ref, wk_ref, bk_ref,
                       wv_ref, bv_ref, wo_ref, bo_ref, o_ref, *, scale):
    nh = wq_ref.shape[0]
    qs = qs_ref[0]                                    # (Lq, dim)  bf16
    ks = ks_ref[0]                                    # (Lk, dim)  bf16
    vs = vs_ref[0]                                    # (Lk, dim)  bf16
    lq = qs.shape[0]
    dim = bo_ref.shape[-1]
    acc = jnp.zeros((lq, dim), jnp.float32)
    bf = jnp.bfloat16
    for h in range(nh):
        qh = jnp.dot(qs, wq_ref[h], preferred_element_type=jnp.float32) + bq_ref[h]
        kh = jnp.dot(ks, wk_ref[h], preferred_element_type=jnp.float32) + bk_ref[h]
        vh = jnp.dot(vs, wv_ref[h], preferred_element_type=jnp.float32) + bv_ref[h]
        # scores: contract the head dim directly (no explicit transpose of K)
        s = jax.lax.dot_general(qh.astype(bf), kh.astype(bf),
                                (((1,), (1,)), ((), ())),
                                preferred_element_type=jnp.float32) * scale
        s = s - jnp.max(s, axis=-1, keepdims=True)
        p = jnp.exp(s)
        p = p * pl.reciprocal(jnp.sum(p, axis=-1, keepdims=True), approx=True)
        oh = jnp.dot(p.astype(bf), vh.astype(bf),
                     preferred_element_type=jnp.float32)          # (Lq, dh)
        acc = acc + jnp.dot(oh.astype(bf), wo_ref[h],
                            preferred_element_type=jnp.float32)   # out-proj slice
    o_ref[0] = acc + bo_ref[...]


def attention_fwd(p, q_in, k_in, v_in, num_heads):
    """SAM-style Attention(q, k, v) with internal dim downsampling, fully fused."""
    B, Lq, dim = q_in.shape
    Lk = k_in.shape[1]
    inner = p["qw"].shape[1]
    dh = inner // num_heads
    scale = 1.0 / float(dh) ** 0.5
    bf = jnp.bfloat16

    def per_head_w(w):        # (dim, inner) -> (H, dim, dh)
        return w.reshape(dim, num_heads, dh).transpose(1, 0, 2).astype(bf)

    def per_head_b(b):        # (inner,) -> (H, 1, dh)
        return b.reshape(num_heads, 1, dh).astype(jnp.float32)

    wq, wk, wv = per_head_w(p["qw"]), per_head_w(p["kw"]), per_head_w(p["vw"])
    bq, bk, bv = per_head_b(p["qb"]), per_head_b(p["kb"]), per_head_b(p["vb"])
    wo = p["ow"].reshape(num_heads, dh, dim).astype(bf)
    bo = p["ob"].reshape(1, dim).astype(jnp.float32)

    return pl.pallas_call(
        functools.partial(_fused_attn_kernel, scale=scale),
        out_shape=jax.ShapeDtypeStruct((B, Lq, dim), jnp.float32),
        grid=(B,),
        in_specs=[
            pl.BlockSpec((1, Lq, dim), lambda b: (b, 0, 0)),
            pl.BlockSpec((1, Lk, dim), lambda b: (b, 0, 0)),
            pl.BlockSpec((1, Lk, dim), lambda b: (b, 0, 0)),
            pl.BlockSpec((num_heads, dim, dh), lambda b: (0, 0, 0)),
            pl.BlockSpec((num_heads, 1, dh), lambda b: (0, 0, 0)),
            pl.BlockSpec((num_heads, dim, dh), lambda b: (0, 0, 0)),
            pl.BlockSpec((num_heads, 1, dh), lambda b: (0, 0, 0)),
            pl.BlockSpec((num_heads, dim, dh), lambda b: (0, 0, 0)),
            pl.BlockSpec((num_heads, 1, dh), lambda b: (0, 0, 0)),
            pl.BlockSpec((num_heads, dh, dim), lambda b: (0, 0, 0)),
            pl.BlockSpec((1, dim), lambda b: (0, 0)),
        ],
        out_specs=pl.BlockSpec((1, Lq, dim), lambda b: (b, 0, 0)),
        compiler_params=pltpu.CompilerParams(dimension_semantics=("parallel",)),
    )(q_in.astype(bf), k_in.astype(bf), v_in.astype(bf),
      wq, bq, wk, bk, wv, bv, wo, bo)


# ---------------------------------------------------------------------------
# Fused 2-layer MLP:  relu(x @ w1 + b1) @ w2 + b2
# ---------------------------------------------------------------------------
def _mlp_kernel(x_ref, w1_ref, b1_ref, w2_ref, b2_ref, o_ref):
    h = jnp.dot(x_ref[...], w1_ref[...], preferred_element_type=jnp.float32) + b1_ref[...]
    h = jnp.maximum(h, 0.0)
    o_ref[...] = jnp.dot(h.astype(jnp.bfloat16), w2_ref[...],
                         preferred_element_type=jnp.float32) + b2_ref[...]


def pallas_mlp(x, w1, b1, w2, b2):
    lead = x.shape[:-1]
    dim = x.shape[-1]
    mlp = w1.shape[1]
    x2 = x.reshape(-1, dim).astype(jnp.bfloat16)
    M = x2.shape[0]
    tm = _pick_tile(M, 256, 8)
    out = pl.pallas_call(
        _mlp_kernel,
        out_shape=jax.ShapeDtypeStruct((M, dim), jnp.float32),
        grid=(M // tm,),
        in_specs=[pl.BlockSpec((tm, dim), lambda i: (i, 0)),
                  pl.BlockSpec((dim, mlp), lambda i: (0, 0)),
                  pl.BlockSpec((1, mlp), lambda i: (0, 0)),
                  pl.BlockSpec((mlp, dim), lambda i: (0, 0)),
                  pl.BlockSpec((1, dim), lambda i: (0, 0))],
        out_specs=pl.BlockSpec((tm, dim), lambda i: (i, 0)),
        compiler_params=pltpu.CompilerParams(dimension_semantics=("parallel",)),
    )(x2, w1.astype(jnp.bfloat16), b1.reshape(1, mlp).astype(jnp.float32),
      w2.astype(jnp.bfloat16), b2.reshape(1, dim).astype(jnp.float32))
    return out.reshape(*lead, dim)


# ---------------------------------------------------------------------------
# Conv3d as lane-dense matmuls:  (Cout, 27*Cin) @ (27*Cin, N*D*H*W)
# ---------------------------------------------------------------------------
def conv3d_3x3x3(x, w, bias=None):
    """Conv3d kernel=3, stride=1, padding=1.  Output last dim = spatial (lane-dense)."""
    N, Cin, D, H, W = x.shape
    Cout = w.shape[0]
    S = D * H * W
    xp = jnp.pad(x, ((0, 0), (0, 0), (1, 1), (1, 1), (1, 1)))
    # TODO(synk): at production sizes replace this wrapper-side im2col (27x HBM
    # inflation) with an in-kernel halo-tile shift-and-accumulate over a tap grid axis.
    taps = [xp[:, :, kd:kd + D, kh:kh + H, kw:kw + W]
            for kd in range(3) for kh in range(3) for kw in range(3)]
    cols = jnp.concatenate(taps, axis=1)                      # (N, 27*Cin, D, H, W)
    cols = cols.reshape(N, 27 * Cin, S)
    cols = jnp.moveaxis(cols, 0, 1).reshape(27 * Cin, N * S)  # spatial last
    wm = jnp.transpose(w, (0, 2, 3, 4, 1)).reshape(Cout, 27 * Cin)
    y = pallas_matmul(wm, cols, bias=bias, bias_axis="m")     # (Cout, N*S)
    y = y.reshape(Cout, N, D, H, W)
    return jnp.moveaxis(y, 1, 0)                              # (N, Cout, D, H, W)


def conv3d_1x1x1(x, w, bias=None):
    N, Cin, D, H, W = x.shape
    Cout = w.shape[0]
    S = D * H * W
    x2 = jnp.moveaxis(x.reshape(N, Cin, S), 0, 1).reshape(Cin, N * S)
    wm = w.reshape(Cout, Cin)
    y = pallas_matmul(wm, x2, bias=bias, bias_axis="m")       # (Cout, N*S)
    return jnp.moveaxis(y.reshape(Cout, N, D, H, W), 1, 0)


# ---------------------------------------------------------------------------
# Trilinear upsample (align_corners=True), fused into one kernel:
#   per (n,c):  out = Md @ (X[nc] @ kron(Mh, Mw).T)
# ---------------------------------------------------------------------------
def _interp_matrix(n_in, n_out):
    if n_out == 1:
        coords = jnp.zeros((1,), jnp.float32)
    else:
        coords = jnp.arange(n_out, dtype=jnp.float32) * (n_in - 1) / (n_out - 1)
    lo = jnp.clip(jnp.floor(coords).astype(jnp.int32), 0, n_in - 1)
    hi = jnp.clip(lo + 1, 0, n_in - 1)
    frac = coords - lo.astype(jnp.float32)
    return (jax.nn.one_hot(lo, n_in, dtype=jnp.float32) * (1.0 - frac)[:, None]
            + jax.nn.one_hot(hi, n_in, dtype=jnp.float32) * frac[:, None])


def _upsample_kernel(x_ref, khw_ref, md_ref, o_ref):
    khw = khw_ref[...]                                   # (H*W, Ho*Wo) bf16
    md = md_ref[...]                                     # (Do, D)      bf16
    for c in range(x_ref.shape[0]):
        t = jnp.dot(x_ref[c], khw, preferred_element_type=jnp.float32)   # (D, Ho*Wo)
        o_ref[c] = jnp.dot(md, t.astype(jnp.bfloat16),
                           preferred_element_type=jnp.float32)           # (Do, Ho*Wo)


def trilinear_upsample(x, factor):
    # F.interpolate(x, scale_factor=factor, mode='trilinear', align_corners=True)
    N, C, D, H, W = x.shape
    Do, Ho, Wo = D * factor, H * factor, W * factor
    nc = N * C
    md = _interp_matrix(D, Do).astype(jnp.bfloat16)                       # (Do, D)
    khwT = jnp.kron(_interp_matrix(H, Ho),
                    _interp_matrix(W, Wo)).T.astype(jnp.bfloat16)         # (H*W, Ho*Wo)
    xr = x.reshape(nc, D, H * W).astype(jnp.bfloat16)
    tc = nc if nc <= 16 else _pick_tile(nc, 16, 1)
    out = pl.pallas_call(
        _upsample_kernel,
        out_shape=jax.ShapeDtypeStruct((nc, Do, Ho * Wo), jnp.float32),
        grid=(nc // tc,),
        in_specs=[pl.BlockSpec((tc, D, H * W), lambda i: (i, 0, 0)),
                  pl.BlockSpec((H * W, Ho * Wo), lambda i: (0, 0)),
                  pl.BlockSpec((Do, D), lambda i: (0, 0))],
        out_specs=pl.BlockSpec((tc, Do, Ho * Wo), lambda i: (i, 0, 0)),
        compiler_params=pltpu.CompilerParams(dimension_semantics=("parallel",)),
    )(xr, khwT, md)
    return out.reshape(N, C, Do, Ho, Wo)


# ---------------------------------------------------------------------------
# Text2ImageTransformer (SAM-style TwoWayTransformer)
# ---------------------------------------------------------------------------
def twoway_block_fwd(p, queries, keys, query_pe, key_pe, num_heads, skip_first_layer_pe):
    if skip_first_layer_pe:
        attn_out = attention_fwd(p["self_attn"], queries, queries, queries, num_heads)
        queries = pallas_layernorm(attn_out, p["norm1"]["g"], p["norm1"]["b"])
    else:
        q = queries + query_pe
        attn_out = attention_fwd(p["self_attn"], q, q, queries, num_heads)
        queries = pallas_add_layernorm(attn_out, queries, p["norm1"]["g"], p["norm1"]["b"])

    q = queries + query_pe
    k = keys + key_pe
    attn_out = attention_fwd(p["cross_t2i"], q, k, keys, num_heads)
    queries = pallas_add_layernorm(attn_out, queries, p["norm2"]["g"], p["norm2"]["b"])

    mlp_out = pallas_mlp(queries, p["mlp_w1"], p["mlp_b1"], p["mlp_w2"], p["mlp_b2"])
    queries = pallas_add_layernorm(mlp_out, queries, p["norm3"]["g"], p["norm3"]["b"])

    q = queries + query_pe
    k = keys + key_pe
    attn_out = attention_fwd(p["cross_i2t"], k, q, queries, num_heads)
    keys = pallas_add_layernorm(attn_out, keys, p["norm4"]["g"], p["norm4"]["b"])
    return queries, keys


def text2image_transformer_fwd(p, image_embedding, text_embedding, num_heads):
    B, C, D, H, W = image_embedding.shape
    img = image_embedding.reshape(B, C, D * H * W).transpose(0, 2, 1)   # (B, N, C)
    text = jnp.broadcast_to(text_embedding, (B,) + text_embedding.shape[1:])
    queries, keys = text, img
    for i, lp in enumerate(p["layers"]):
        queries, keys = twoway_block_fwd(lp, queries, keys, text, img,
                                         num_heads, skip_first_layer_pe=(i == 0))
    # final_attn_token_to_image / norm_final only update `queries`, which is
    # discarded (only the image-side `keys` is returned, as in the reference) ->
    # dead compute removed.
    return keys.transpose(0, 2, 1).reshape(B, C, D, H, W)


# ---------------------------------------------------------------------------
# VIT_MLAHead_h  (4-branch MLA head: Conv3d/InstanceNorm3d/ReLU + trilinear up)
# ---------------------------------------------------------------------------
def head_branch_fwd(p, x):
    x = conv3d_3x3x3(x, p["w1"])          # bias=False
    x = instance_norm_relu(x)
    x = conv3d_3x3x3(x, p["w2"])          # bias=False
    x = instance_norm_relu(x)
    return x


def vit_mlahead_fwd(p, inputs, scale_factor1, scale_factor2):
    heads = [head_branch_fwd(p["heads"][i], inputs[i]) for i in range(4)]
    x = jnp.concatenate(heads, axis=1)
    # per-branch upsample then concat == concat then upsample (per-channel op);
    # doing it once after the concat saves 3 kernel launches.
    x = trilinear_upsample(x, scale_factor1)
    x = conv3d_3x3x3(x, p["cls_w1"], p["cls_b1"])
    x = instance_norm_relu(x)
    x = conv3d_1x1x1(x, p["cls_w2"], p["cls_b2"])
    x = trilinear_upsample(x, scale_factor2)
    return x


# ---------------------------------------------------------------------------
# MyDecoder forward
# ---------------------------------------------------------------------------
def my_decoder_fwd(params, feature_list, image_feature):
    feats = list(feature_list)
    # feature_list[-1] = self.trans(feature_list[-1], self.text_embedding)
    feats[-1] = text2image_transformer_fwd(params["trans"], feats[-1],
                                           params["text_embedding"], NUM_HEADS)
    # feature_list.append(image_feature)
    feats.append(image_feature)
    # x_out = self.mlahead(feature_list, 2, 128 // 64)
    return vit_mlahead_fwd(params["mlahead"], feats, 2, 128 // 64)


# ---------------------------------------------------------------------------
# deterministic parameter init (synthetic — no checkpoint loading)
# ---------------------------------------------------------------------------
def _normal(key, shape, scale=0.05):
    return scale * jax.random.normal(key, shape, dtype=jnp.float32)


def init_attention(key, dim, inner):
    ks = jax.random.split(key, 4)
    return dict(
        qw=_normal(ks[0], (dim, inner)), qb=jnp.zeros((inner,), jnp.float32),
        kw=_normal(ks[1], (dim, inner)), kb=jnp.zeros((inner,), jnp.float32),
        vw=_normal(ks[2], (dim, inner)), vb=jnp.zeros((inner,), jnp.float32),
        ow=_normal(ks[3], (inner, dim)), ob=jnp.zeros((dim,), jnp.float32),
    )


def init_ln(dim):
    return dict(g=jnp.ones((dim,), jnp.float32), b=jnp.zeros((dim,), jnp.float32))


def init_block(key, dim, mlp_dim, dsr):
    ks = jax.random.split(key, 5)
    return dict(
        self_attn=init_attention(ks[0], dim, dim),
        norm1=init_ln(dim),
        cross_t2i=init_attention(ks[1], dim, dim // dsr),
        norm2=init_ln(dim),
        mlp_w1=_normal(ks[2], (dim, mlp_dim)), mlp_b1=jnp.zeros((mlp_dim,), jnp.float32),
        mlp_w2=_normal(ks[3], (mlp_dim, dim)), mlp_b2=jnp.zeros((dim,), jnp.float32),
        norm3=init_ln(dim),
        norm4=init_ln(dim),
        cross_i2t=init_attention(ks[4], dim, dim // dsr),
    )


def init_trans(key, dim, mlp_dim, depth, dsr):
    ks = jax.random.split(key, depth + 1)
    return dict(
        layers=[init_block(ks[i], dim, mlp_dim, dsr) for i in range(depth)],
        final_attn=init_attention(ks[depth], dim, dim // dsr),   # kept for parity; unused
        norm_final=init_ln(dim),
    )


def init_head_branch(key, cin, cmid):
    k1, k2 = jax.random.split(key)
    return dict(w1=_normal(k1, (cmid, cin, 3, 3, 3)),
                w2=_normal(k2, (cmid, cmid, 3, 3, 3)))


def init_mlahead(key, mla_channels, mh_channels, num_classes):
    ks = jax.random.split(key, 6)
    return dict(
        heads=[init_head_branch(ks[i], mla_channels, mh_channels) for i in range(4)],
        cls_w1=_normal(ks[4], (mh_channels, 4 * mh_channels, 3, 3, 3)),
        cls_b1=jnp.zeros((mh_channels,), jnp.float32),
        cls_w2=_normal(ks[5], (num_classes, mh_channels, 1, 1, 1)),
        cls_b2=jnp.zeros((num_classes,), jnp.float32),
    )


def init_params(key):
    k_trans, k_mla, k_text = jax.random.split(key, 3)
    return dict(
        trans=init_trans(k_trans, EMBED_DIM, MLP_DIM, DEPTH, DOWNSAMPLE_RATE),
        mlahead=init_mlahead(k_mla, EMBED_DIM, MLAHEAD_CHANNELS, NUM_CLASSES),
        # TODO(synk): real module loads text embedding from 'txt_encoding.pth'; synthesized here.
        text_embedding=_normal(k_text, (1, TEXT_LEN, EMBED_DIM)),
    )


# ---------------------------------------------------------------------------
if __name__ == "__main__":
    key = jax.random.PRNGKey(0)
    k_params, k_f0, k_f1, k_f2, k_img = jax.random.split(key, 5)

    B, C, D, H, W = 1, EMBED_DIM, 4, 8, 8   # small NCDHW features
    feature_list = [
        jax.random.normal(k_f0, (B, C, D, H, W), dtype=jnp.float32),
        jax.random.normal(k_f1, (B, C, D, H, W), dtype=jnp.float32),
        jax.random.normal(k_f2, (B, C, D, H, W), dtype=jnp.float32),
    ]
    image_feature = jax.random.normal(k_img, (B, C, D, H, W), dtype=jnp.float32)

    params = init_params(k_params)

    x_out = my_decoder_fwd(params, feature_list, image_feature)
    jax.block_until_ready(x_out)

    expected = (B, NUM_CLASSES, D * 2 * 2, H * 2 * 2, W * 2 * 2)
    assert x_out.shape == expected, (x_out.shape, expected)
    assert bool(jnp.all(jnp.isfinite(x_out)))
    print("KERNEL_OK")
</pallas_src>

<mosaic_0001>
module attributes {stable_mosaic.version = 11 : i64} {
  func.func @_fused_attn_kernel(%arg0: i32, %arg1: memref<1x8x32xbf16, #tpu.memory_space<vmem>>, %arg2: memref<1x8x32xbf16, #tpu.memory_space<vmem>>, %arg3: memref<1x8x32xbf16, #tpu.memory_space<vmem>>, %arg4: memref<4x32x8xbf16, #tpu.memory_space<vmem>>, %arg5: memref<4x1x8xf32, #tpu.memory_space<vmem>>, %arg6: memref<4x32x8xbf16, #tpu.memory_space<vmem>>, %arg7: memref<4x1x8xf32, #tpu.memory_space<vmem>>, %arg8: memref<4x32x8xbf16, #tpu.memory_space<vmem>>, %arg9: memref<4x1x8xf32, #tpu.memory_space<vmem>>, %arg10: memref<4x8x32xbf16, #tpu.memory_space<vmem>>, %arg11: memref<1x32xf32, #tpu.memory_space<vmem>>, %arg12: memref<1x8x32xf32, #tpu.memory_space<vmem>>) attributes {dimension_semantics = [#tpu.dimension_semantics<parallel>], iteration_bounds = array<i64: 1>, scalar_prefetch = 0 : i64, scratch_operands = 0 : i64, tpu.core_type = #tpu.core_type<tc>, window_params = [{transform_indices = @transform_0, window_bounds = array<i64: 1, 8, 32>}, {transform_indices = @transform_1, window_bounds = array<i64: 1, 8, 32>}, {transform_indices = @transform_2, window_bounds = array<i64: 1, 8, 32>}, {pipeline_mode = #tpu.pipeline_mode<synchronous>, transform_indices = @transform_3, window_bounds = array<i64: 4, 32, 8>}, {pipeline_mode = #tpu.pipeline_mode<synchronous>, transform_indices = @transform_4, window_bounds = array<i64: 4, 1, 8>}, {pipeline_mode = #tpu.pipeline_mode<synchronous>, transform_indices = @transform_5, window_bounds = array<i64: 4, 32, 8>}, {pipeline_mode = #tpu.pipeline_mode<synchronous>, transform_indices = @transform_6, window_bounds = array<i64: 4, 1, 8>}, {pipeline_mode = #tpu.pipeline_mode<synchronous>, transform_indices = @transform_7, window_bounds = array<i64: 4, 32, 8>}, {pipeline_mode = #tpu.pipeline_mode<synchronous>, transform_indices = @transform_8, window_bounds = array<i64: 4, 1, 8>}, {pipeline_mode = #tpu.pipeline_mode<synchronous>, transform_indices = @transform_9, window_bounds = array<i64: 4, 8, 32>}, {pipeline_mode = #tpu.pipeline_mode<synchronous>, transform_indices = @transform_10, window_bounds = array<i64: 1, 32>}, {transform_indices = @transform_11, window_bounds = array<i64: 1, 8, 32>}]} {
    %c0 = arith.constant 0 : index
    %c0_0 = arith.constant 0 : index
    %c0_1 = arith.constant 0 : index
    %0 = vector.load %arg1[%c0, %c0_0, %c0_1] : memref<1x8x32xbf16, #tpu.memory_space<vmem>>, vector<1x8x32xbf16>
    %1 = vector.shape_cast %0 : vector<1x8x32xbf16> to vector<8x32xbf16>
    %c0_2 = arith.constant 0 : index
    %c0_3 = arith.constant 0 : index
    %c0_4 = arith.constant 0 : index
    %2 = vector.load %arg2[%c0_2, %c0_3, %c0_4] : memref<1x8x32xbf16, #tpu.memory_space<vmem>>, vector<1x8x32xbf16>
    %3 = vector.shape_cast %2 : vector<1x8x32xbf16> to vector<8x32xbf16>
    %c0_5 = arith.constant 0 : index
    %c0_6 = arith.constant 0 : index
    %c0_7 = arith.constant 0 : index
    %4 = vector.load %arg3[%c0_5, %c0_6, %c0_7] : memref<1x8x32xbf16, #tpu.memory_space<vmem>>, vector<1x8x32xbf16>
    %5 = vector.shape_cast %4 : vector<1x8x32xbf16> to vector<8x32xbf16>
    %cst = arith.constant 0.000000e+00 : f32
    %6 = vector.broadcast %cst : f32 to vector<8x32xf32>
    %c0_8 = arith.constant 0 : index
    %c0_9 = arith.constant 0 : index
    %c0_10 = arith.constant 0 : index
    %7 = vector.load %arg4[%c0_8, %c0_9, %c0_10] : memref<4x32x8xbf16, #tpu.memory_space<vmem>>, vector<1x32x8xbf16>
    %8 = vector.shape_cast %7 : vector<1x32x8xbf16> to vector<32x8xbf16>
    %cst_11 = arith.constant dense<0.000000e+00> : vector<8x8xf32>
    %9 = tpu.matmul %1, %8, %cst_11 {dimension_numbers = #tpu.dot_dimension_numbers<[1], [0], [0], [1], [0, 0, 1, 1], [], []>} : vector<8x32xbf16>, vector<32x8xbf16>, vector<8x8xf32> -> vector<8x8xf32>
    %c0_12 = arith.constant 0 : index
    %c0_13 = arith.constant 0 : index
    %c0_14 = arith.constant 0 : index
    %10 = vector.load %arg5[%c0_12, %c0_13, %c0_14] : memref<4x1x8xf32, #tpu.memory_space<vmem>>, vector<1x1x8xf32>
    %11 = vector.shape_cast %10 : vector<1x1x8xf32> to vector<1x8xf32>
    %12 = vector.broadcast %11 : vector<1x8xf32> to vector<8x8xf32>
    %13 = arith.addf %9, %12 : vector<8x8xf32>
    %c0_15 = arith.constant 0 : index
    %c0_16 = arith.constant 0 : index
    %c0_17 = arith.constant 0 : index
    %14 = vector.load %arg6[%c0_15, %c0_16, %c0_17] : memref<4x32x8xbf16, #tpu.memory_space<vmem>>, vector<1x32x8xbf16>
    %15 = vector.shape_cast %14 : vector<1x32x8xbf16> to vector<32x8xbf16>
    %cst_18 = arith.constant dense<0.000000e+00> : vector<8x8xf32>
    %16 = tpu.matmul %3, %15, %cst_18 {dimension_numbers = #tpu.dot_dimension_numbers<[1], [0], [0], [1], [0, 0, 1, 1], [], []>} : vector<8x32xbf16>, vector<32x8xbf16>, vector<8x8xf32> -> vector<8x8xf32>
    %c0_19 = arith.constant 0 : index
    %c0_20 = arith.constant 0 : index
    %c0_21 = arith.constant 0 : index
    %17 = vector.load %arg7[%c0_19, %c0_20, %c0_21] : memref<4x1x8xf32, #tpu.memory_space<vmem>>, vector<1x1x8xf32>
    %18 = vector.shape_cast %17 : vector<1x1x8xf32> to vector<1x8xf32>
    %19 = vector.broadcast %18 : vector<1x8xf32> to vector<8x8xf32>
    %20 = arith.addf %16, %19 : vector<8x8xf32>
    %c0_22 = arith.constant 0 : index
    %c0_23 = arith.constant 0 : index
    %c0_24 = arith.constant 0 : index
    %21 = vector.load %arg8[%c0_22, %c0_23, %c0_24] : memref<4x32x8xbf16, #tpu.memory_space<vmem>>, vector<1x32x8xbf16>
    %22 = vector.shape_cast %21 : vector<1x32x8xbf16> to vector<32x8xbf16>
    %cst_25 = arith.constant dense<0.000000e+00> : vector<8x8xf32>
    %23 = tpu.matmul %5, %22, %cst_25 {dimension_numbers = #tpu.dot_dimension_numbers<[1], [0], [0], [1], [0, 0, 1, 1], [], []>} : vector<8x32xbf16>, vector<32x8xbf16>, vector<8x8xf32> -> vector<8x8xf32>
    %c0_26 = arith.constant 0 : index
    %c0_27 = arith.constant 0 : index
    %c0_28 = arith.constant 0 : index
    %24 = vector.load %arg9[%c0_26, %c0_27, %c0_28] : memref<4x1x8xf32, #tpu.memory_space<vmem>>, vector<1x1x8xf32>
    %25 = vector.shape_cast %24 : vector<1x1x8xf32> to vector<1x8xf32>
    %26 = vector.broadcast %25 : vector<1x8xf32> to vector<8x8xf32>
    %27 = arith.addf %23, %26 : vector<8x8xf32>
    %28 = arith.truncf %13 : vector<8x8xf32> to vector<8x8xbf16>
    %29 = arith.truncf %20 : vector<8x8xf32> to vector<8x8xbf16>
    %cst_29 = arith.constant dense<0.000000e+00> : vector<8x8xf32>
    %30 = tpu.matmul %28, %29, %cst_29 {dimension_numbers = #tpu.dot_dimension_numbers<[1], [1], [0], [0], [0, 0, 1, 0], [], []>} : vector<8x8xbf16>, vector<8x8xbf16>, vector<8x8xf32> -> vector<8x8xf32>
    %cst_30 = arith.constant 0.353553385 : f32
    %31 = vector.broadcast %cst_30 : f32 to vector<8x8xf32>
    %32 = arith.mulf %30, %31 : vector<8x8xf32>
    %cst_31 = arith.constant dense<0xFF800000> : vector<8xf32>
    %33 = vector.multi_reduction <maximumf>, %32, %cst_31 [1] : vector<8x8xf32> to vector<8xf32>
    %34 = vector.shape_cast %33 : vector<8xf32> to vector<8x1xf32>
    %35 = vector.broadcast %34 : vector<8x1xf32> to vector<8x8xf32>
    %36 = arith.subf %32, %35 : vector<8x8xf32>
    %37 = math.exp %36 : vector<8x8xf32>
    %cst_32 = arith.constant dense<0.000000e+00> : vector<8xf32>
    %38 = vector.multi_reduction <add>, %37, %cst_32 [1] : vector<8x8xf32> to vector<8xf32>
    %39 = vector.shape_cast %38 : vector<8xf32> to vector<8x1xf32>
    %40 = tpu.reciprocal %39 {approx = true} : vector<8x1xf32> -> vector<8x1xf32>
    %41 = vector.broadcast %40 : vector<8x1xf32> to vector<8x8xf32>
    %42 = arith.mulf %37, %41 : vector<8x8xf32>
    %43 = arith.truncf %42 : vector<8x8xf32> to vector<8x8xbf16>
    %44 = arith.truncf %27 : vector<8x8xf32> to vector<8x8xbf16>
    %cst_33 = arith.constant dense<0.000000e+00> : vector<8x8xf32>
    %45 = tpu.matmul %43, %44, %cst_33 {dimension_numbers = #tpu.dot_dimension_numbers<[1], [0], [0], [1], [0, 0, 1, 1], [], []>} : vector<8x8xbf16>, vector<8x8xbf16>, vector<8x8xf32> -> vector<8x8xf32>
    %46 = arith.truncf %45 : vector<8x8xf32> to vector<8x8xbf16>
    %c0_34 = arith.constant 0 : index
    %c0_35 = arith.constant 0 : index
    %c0_36 = arith.constant 0 : index
    %47 = vector.load %arg10[%c0_34, %c0_35, %c0_36] : memref<4x8x32xbf16, #tpu.memory_space<vmem>>, vector<1x8x32xbf16>
    %48 = vector.shape_cast %47 : vector<1x8x32xbf16> to vector<8x32xbf16>
    %cst_37 = arith.constant dense<0.000000e+00> : vector<8x32xf32>
    %49 = tpu.matmul %46, %48, %cst_37 {dimension_numbers = #tpu.dot_dimension_numbers<[1], [0], [0], [1], [0, 0, 1, 1], [], []>} : vector<8x8xbf16>, vector<8x32xbf16>, vector<8x32xf32> -> vector<8x32xf32>
    %50 = arith.addf %6, %49 : vector<8x32xf32>
    %c1 = arith.constant 1 : index
    %c0_38 = arith.constant 0 : index
    %c0_39 = arith.constant 0 : index
    %51 = vector.load %arg4[%c1, %c0_38, %c0_39] : memref<4x32x8xbf16, #tpu.memory_space<vmem>>, vector<1x32x8xbf16>
    %52 = vector.shape_cast %51 : vector<1x32x8xbf16> to vector<32x8xbf16>
    %cst_40 = arith.constant dense<0.000000e+00> : vector<8x8xf32>
    %53 = tpu.matmul %1, %52, %cst_40 {dimension_numbers = #tpu.dot_dimension_numbers<[1], [0], [0], [1], [0, 0, 1, 1], [], []>} : vector<8x32xbf16>, vector<32x8xbf16>, vector<8x8xf32> -> vector<8x8xf32>
    %c1_41 = arith.constant 1 : index
    %c0_42 = arith.constant 0 : index
    %c0_43 = arith.constant 0 : index
    %54 = vector.load %arg5[%c1_41, %c0_42, %c0_43] : memref<4x1x8xf32, #tpu.memory_space<vmem>>, vector<1x1x8xf32>
    %55 = vector.shape_cast %54 : vector<1x1x8xf32> to vector<1x8xf32>
    %56 = vector.broadcast %55 : vector<1x8xf32> to vector<8x8xf32>
    %57 = arith.addf %53, %56 : vector<8x8xf32>
    %c1_44 = arith.constant 1 : index
    %c0_45 = arith.constant 0 : index
    %c0_46 = arith.constant 0 : index
    %58 = vector.load %arg6[%c1_44, %c0_45, %c0_46] : memref<4x32x8xbf16, #tpu.memory_space<vmem>>, vector<1x32x8xbf16>
    %59 = vector.shape_cast %58 : vector<1x32x8xbf16> to vector<32x8xbf16>
    %cst_47 = arith.constant dense<0.000000e+00> : vector<8x8xf32>
    %60 = tpu.matmul %3, %59, %cst_47 {dimension_numbers = #tpu.dot_dimension_numbers<[1], [0], [0], [1], [0, 0, 1, 1], [], []>} : vector<8x32xbf16>, vector<32x8xbf16>, vector<8x8xf32> -> vector<8x8xf32>
    %c1_48 = arith.constant 1 : index
    %c0_49 = arith.constant 0 : index
    %c0_50 = arith.constant 0 : index
    %61 = vector.load %arg7[%c1_48, %c0_49, %c0_50] : memref<4x1x8xf32, #tpu.memory_space<vmem>>, vector<1x1x8xf32>
    %62 = vector.shape_cast %61 : vector<1x1x8xf32> to vector<1x8xf32>
    %63 = vector.broadcast %62 : vector<1x8xf32> to vector<8x8xf32>
    %64 = arith.addf %60, %63 : vector<8x8xf32>
    %c1_51 = arith.constant 1 : index
    %c0_52 = arith.constant 0 : index
    %c0_53 = arith.constant 0 : index
    %65 = vector.load %arg8[%c1_51, %c0_52, %c0_53] : memref<4x32x8xbf16, #tpu.memory_space<vmem>>, vector<1x32x8xbf16>
    %66 = vector.shape_cast %65 : vector<1x32x8xbf16> to vector<32x8xbf16>
    %cst_54 = arith.constant dense<0.000000e+00> : vector<8x8xf32>
    %67 = tpu.matmul %5, %66, %cst_54 {dimension_numbers = #tpu.dot_dimension_numbers<[1], [0], [0], [1], [0, 0, 1, 1], [], []>} : vector<8x32xbf16>, vector<32x8xbf16>, vector<8x8xf32> -> vector<8x8xf32>
    %c1_55 = arith.constant 1 : index
    %c0_56 = arith.constant 0 : index
    %c0_57 = arith.constant 0 : index
    %68 = vector.load %arg9[%c1_55, %c0_56, %c0_57] : memref<4x1x8xf32, #tpu.memory_space<vmem>>, vector<1x1x8xf32>
    %69 = vector.shape_cast %68 : vector<1x1x8xf32> to vector<1x8xf32>
    %70 = vector.broadcast %69 : vector<1x8xf32> to vector<8x8xf32>
    %71 = arith.addf %67, %70 : vector<8x8xf32>
    %72 = arith.truncf %57 : vector<8x8xf32> to vector<8x8xbf16>
    %73 = arith.truncf %64 : vector<8x8xf32> to vector<8x8xbf16>
    %cst_58 = arith.constant dense<0.000000e+00> : vector<8x8xf32>
    %74 = tpu.matmul %72, %73, %cst_58 {dimension_numbers = #tpu.dot_dimension_numbers<[1], [1], [0], [0], [0, 0, 1, 0], [], []>} : vector<8x8xbf16>, vector<8x8xbf16>, vector<8x8xf32> -> vector<8x8xf32>
    %cst_59 = arith.constant 0.353553385 : f32
    %75 = vector.broadcast %cst_59 : f32 to vector<8x8xf32>
    %76 = arith.mulf %74, %75 : vector<8x8xf32>
    %cst_60 = arith.constant dense<0xFF800000> : vector<8xf32>
    %77 = vector.multi_reduction <maximumf>, %76, %cst_60 [1] : vector<8x8xf32> to vector<8xf32>
    %78 = vector.shape_cast %77 : vector<8xf32> to vector<8x1xf32>
    %79 = vector.broadcast %78 : vector<8x1xf32> to vector<8x8xf32>
    %80 = arith.subf %76, %79 : vector<8x8xf32>
    %81 = math.exp %80 : vector<8x8xf32>
    %cst_61 = arith.constant dense<0.000000e+00> : vector<8xf32>
    %82 = vector.multi_reduction <add>, %81, %cst_61 [1] : vector<8x8xf32> to vector<8xf32>
    %83 = vector.shape_cast %82 : vector<8xf32> to vector<8x1xf32>
    %84 = tpu.reciprocal %83 {approx = true} : vector<8x1xf32> -> vector<8x1xf32>
    %85 = vector.broadcast %84 : vector<8x1xf32> to vector<8x8xf32>
    %86 = arith.mulf %81, %85 : vector<8x8xf32>
    %87 = arith.truncf %86 : vector<8x8xf32> to vector<8x8xbf16>
    %88 = arith.truncf %71 : vector<8x8xf32> to vector<8x8xbf16>
    %cst_62 = arith.constant dense<0.000000e+00> : vector<8x8xf32>
    %89 = tpu.matmul %87, %88, %cst_62 {dimension_numbers = #tpu.dot_dimension_numbers<[1], [0], [0], [1], [0, 0, 1, 1], [], []>} : vector<8x8xbf16>, vector<8x8xbf16>, vector<8x8xf32> -> vector<8x8xf32>
    %90 = arith.truncf %89 : vector<8x8xf32> to vector<8x8xbf16>
    %c1_63 = arith.constant 1 : index
    %c0_64 = arith.constant 0 : index
    %c0_65 = arith.constant 0 : index
    %91 = vector.load %arg10[%c1_63, %c0_64, %c0_65] : memref<4x8x32xbf16, #tpu.memory_space<vmem>>, vector<1x8x32xbf16>
    %92 = vector.shape_cast %91 : vector<1x8x32xbf16> to vector<8x32xbf16>
    %cst_66 = arith.constant dense<0.000000e+00> : vector<8x32xf32>
    %93 = tpu.matmul %90, %92, %cst_66 {dimension_numbers = #tpu.dot_dimension_numbers<[1], [0], [0], [1], [0, 0, 1, 1], [], []>} : vector<8x8xbf16>, vector<8x32xbf16>, vector<8x32xf32> -> vector<8x32xf32>
    %94 = arith.addf %50, %93 : vector<8x32xf32>
    %c2 = arith.constant 2 : index
    %c0_67 = arith.constant 0 : index
    %c0_68 = arith.constant 0 : index
    %95 = vector.load %arg4[%c2, %c0_67, %c0_68] : memref<4x32x8xbf16, #tpu.memory_space<vmem>>, vector<1x32x8xbf16>
    %96 = vector.shape_cast %95 : vector<1x32x8xbf16> to vector<32x8xbf16>
    %cst_69 = arith.constant dense<0.000000e+00> : vector<8x8xf32>
    %97 = tpu.matmul %1, %96, %cst_69 {dimension_numbers = #tpu.dot_dimension_numbers<[1], [0], [0], [1], [0, 0, 1, 1], [], []>} : vector<8x32xbf16>, vector<32x8xbf16>, vector<8x8xf32> -> vector<8x8xf32>
    %c2_70 = arith.constant 2 : index
    %c0_71 = arith.constant 0 : index
    %c0_72 = arith.constant 0 : index
    %98 = vector.load %arg5[%c2_70, %c0_71, %c0_72] : memref<4x1x8xf32, #tpu.memory_space<vmem>>, vector<1x1x8xf32>
    %99 = vector.shape_cast %98 : vector<1x1x8xf32> to vector<1x8xf32>
    %100 = vector.broadcast %99 : vector<1x8xf32> to vector<8x8xf32>
    %101 = arith.addf %97, %100 : vector<8x8xf32>
    %c2_73 = arith.constant 2 : index
    %c0_74 = arith.constant 0 : index
    %c0_75 = arith.constant 0 : index
    %102 = vector.load %arg6[%c2_73, %c0_74, %c0_75] : memref<4x32x8xbf16, #tpu.memory_space<vmem>>, vector<1x32x8xbf16>
    %103 = vector.shape_cast %102 : vector<1x32x8xbf16> to vector<32x8xbf16>
    %cst_76 = arith.constant dense<0.000000e+00> : vector<8x8xf32>
    %104 = tpu.matmul %3, %103, %cst_76 {dimension_numbers = #tpu.dot_dimension_numbers<[1], [0], [0], [1], [0, 0, 1, 1], [], []>} : vector<8x32xbf16>, vector<32x8xbf16>, vector<8x8xf32> -> vector<8x8xf32>
    %c2_77 = arith.constant 2 : index
    %c0_78 = arith.constant 0 : index
    %c0_79 = arith.constant 0 : index
    %105 = vector.load %arg7[%c2_77, %c0_78, %c0_79] : memref<4x1x8xf32, #tpu.memory_space<vmem>>, vector<1x1x8xf32>
    %106 = vector.shape_cast %105 : vector<1x1x8xf32> to vector<1x8xf32>
    %107 = vector.broadcast %106 : vector<1x8xf32> to vector<8x8xf32>
    %108 = arith.addf %104, %107 : vector<8x8xf32>
    %c2_80 = arith.constant 2 : index
    %c0_81 = arith.constant 0 : index
    %c0_82 = arith.constant 0 : index
    %109 = vector.load %arg8[%c2_80, %c0_81, %c0_82] : memref<4x32x8xbf16, #tpu.memory_space<vmem>>, vector<1x32x8xbf16>
    %110 = vector.shape_cast %109 : vector<1x32x8xbf16> to vector<32x8xbf16>
    %cst_83 = arith.constant dense<0.000000e+00> : vector<8x8xf32>
    %111 = tpu.matmul %5, %110, %cst_83 {dimension_numbers = #tpu.dot_dimension_numbers<[1], [0], [0], [1], [0, 0, 1, 1], [], []>} : vector<8x32xbf16>, vector<32x8xbf16>, vector<8x8xf32> -> vector<8x8xf32>
    %c2_84 = arith.constant 2 : index
    %c0_85 = arith.constant 0 : index
    %c0_86 = arith.constant 0 : index
    %112 = vector.load %arg9[%c2_84, %c0_85, %c0_86] : memref<4x1x8xf32, #tpu.memory_space<vmem>>, vector<1x1x8xf32>
    %113 = vector.shape_cast %112 : vector<1x1x8xf32> to vector<1x8xf32>
    %114 = vector.broadcast %113 : vector<1x8xf32> to vector<8x8xf32>
    %115 = arith.addf %111, %114 : vector<8x8xf32>
    %116 = arith.truncf %101 : vector<8x8xf32> to vector<8x8xbf16>
    %117 = arith.truncf %108 : vector<8x8xf32> to vector<8x8xbf16>
    %cst_87 = arith.constant dense<0.000000e+00> : vector<8x8xf32>
    %118 = tpu.matmul %116, %117, %cst_87 {dimension_numbers = #tpu.dot_dimension_numbers<[1], [1], [0], [0], [0, 0, 1, 0], [], []>} : vector<8x8xbf16>, vector<8x8xbf16>, vector<8x8xf32> -> vector<8x8xf32>
    %cst_88 = arith.constant 0.353553385 : f32
    %119 = vector.broadcast %cst_88 : f32 to vector<8x8xf32>
    %120 = arith.mulf %118, %119 : vector<8x8xf32>
    %cst_89 = arith.constant dense<0xFF800000> : vector<8xf32>
    %121 = vector.multi_reduction <maximumf>, %120, %cst_89 [1] : vector<8x8xf32> to vector<8xf32>
    %122 = vector.shape_cast %121 : vector<8xf32> to vector<8x1xf32>
    %123 = vector.broadcast %122 : vector<8x1xf32> to vector<8x8xf32>
    %124 = arith.subf %120, %123 : vector<8x8xf32>
    %125 = math.exp %124 : vector<8x8xf32>
    %cst_90 = arith.constant dense<0.000000e+00> : vector<8xf32>
    %126 = vector.multi_reduction <add>, %125, %cst_90 [1] : vector<8x8xf32> to vector<8xf32>
    %127 = vector.shape_cast %126 : vector<8xf32> to vector<8x1xf32>
    %128 = tpu.reciprocal %127 {approx = true} : vector<8x1xf32> -> vector<8x1xf32>
    %129 = vector.broadcast %128 : vector<8x1xf32> to vector<8x8xf32>
    %130 = arith.mulf %125, %129 : vector<8x8xf32>
    %131 = arith.truncf %130 : vector<8x8xf32> to vector<8x8xbf16>
    %132 = arith.truncf %115 : vector<8x8xf32> to vector<8x8xbf16>
    %cst_91 = arith.constant dense<0.000000e+00> : vector<8x8xf32>
    %133 = tpu.matmul %131, %132, %cst_91 {dimension_numbers = #tpu.dot_dimension_numbers<[1], [0], [0], [1], [0, 0, 1, 1], [], []>} : vector<8x8xbf16>, vector<8x8xbf16>, vector<8x8xf32> -> vector<8x8xf32>
    %134 = arith.truncf %133 : vector<8x8xf32> to vector<8x8xbf16>
    %c2_92 = arith.constant 2 : index
    %c0_93 = arith.constant 0 : index
    %c0_94 = arith.constant 0 : index
    %135 = vector.load %arg10[%c2_92, %c0_93, %c0_94] : memref<4x8x32xbf16, #tpu.memory_space<vmem>>, vector<1x8x32xbf16>
    %136 = vector.shape_cast %135 : vector<1x8x32xbf16> to vector<8x32xbf16>
    %cst_95 = arith.constant dense<0.000000e+00> : vector<8x32xf32>
    %137 = tpu.matmul %134, %136, %cst_95 {dimension_numbers = #tpu.dot_dimension_numbers<[1], [0], [0], [1], [0, 0, 1, 1], [], []>} : vector<8x8xbf16>, vector<8x32xbf16>, vector<8x32xf32> -> vector<8x32xf32>
    %138 = arith.addf %94, %137 : vector<8x32xf32>
    %c3 = arith.constant 3 : index
    %c0_96 = arith.constant 0 : index
    %c0_97 = arith.constant 0 : index
    %139 = vector.load %arg4[%c3, %c0_96, %c0_97] : memref<4x32x8xbf16, #tpu.memory_space<vmem>>, vector<1x32x8xbf16>
    %140 = vector.shape_cast %139 : vector<1x32x8xbf16> to vector<32x8xbf16>
    %cst_98 = arith.constant dense<0.000000e+00> : vector<8x8xf32>
    %141 = tpu.matmul %1, %140, %cst_98 {dimension_numbers = #tpu.dot_dimension_numbers<[1], [0], [0], [1], [0, 0, 1, 1], [], []>} : vector<8x32xbf16>, vector<32x8xbf16>, vector<8x8xf32> -> vector<8x8xf32>
    %c3_99 = arith.constant 3 : index
    %c0_100 = arith.constant 0 : index
    %c0_101 = arith.constant 0 : index
    %142 = vector.load %arg5[%c3_99, %c0_100, %c0_101] : memref<4x1x8xf32, #tpu.memory_space<vmem>>, vector<1x1x8xf32>
    %143 = vector.shape_cast %142 : vector<1x1x8xf32> to vector<1x8xf32>
    %144 = vector.broadcast %143 : vector<1x8xf32> to vector<8x8xf32>
    %145 = arith.addf %141, %144 : vector<8x8xf32>
    %c3_102 = arith.constant 3 : index
    %c0_103 = arith.constant 0 : index
    %c0_104 = arith.constant 0 : index
    %146 = vector.load %arg6[%c3_102, %c0_103, %c0_104] : memref<4x32x8xbf16, #tpu.memory_space<vmem>>, vector<1x32x8xbf16>
    %147 = vector.shape_cast %146 : vector<1x32x8xbf16> to vector<32x8xbf16>
    %cst_105 = arith.constant dense<0.000000e+00> : vector<8x8xf32>
    %148 = tpu.matmul %3, %147, %cst_105 {dimension_numbers = #tpu.dot_dimension_numbers<[1], [0], [0], [1], [0, 0, 1, 1], [], []>} : vector<8x32xbf16>, vector<32x8xbf16>, vector<8x8xf32> -> vector<8x8xf32>
    %c3_106 = arith.constant 3 : index
    %c0_107 = arith.constant 0 : index
    %c0_108 = arith.constant 0 : index
    %149 = vector.load %arg7[%c3_106, %c0_107, %c0_108] : memref<4x1x8xf32, #tpu.memory_space<vmem>>, vector<1x1x8xf32>
    %150 = vector.shape_cast %149 : vector<1x1x8xf32> to vector<1x8xf32>
    %151 = vector.broadcast %150 : vector<1x8xf32> to vector<8x8xf32>
    %152 = arith.addf %148, %151 : vector<8x8xf32>
    %c3_109 = arith.constant 3 : index
    %c0_110 = arith.constant 0 : index
    %c0_111 = arith.constant 0 : index
    %153 = vector.load %arg8[%c3_109, %c0_110, %c0_111] : memref<4x32x8xbf16, #tpu.memory_space<vmem>>, vector<1x32x8xbf16>
    %154 = vector.shape_cast %153 : vector<1x32x8xbf16> to vector<32x8xbf16>
    %cst_112 = arith.constant dense<0.000000e+00> : vector<8x8xf32>
    %155 = tpu.matmul %5, %154, %cst_112 {dimension_numbers = #tpu.dot_dimension_numbers<[1], [0], [0], [1], [0, 0, 1, 1], [], []>} : vector<8x32xbf16>, vector<32x8xbf16>, vector<8x8xf32> -> vector<8x8xf32>
    %c3_113 = arith.constant 3 : index
    %c0_114 = arith.constant 0 : index
    %c0_115 = arith.constant 0 : index
    %156 = vector.load %arg9[%c3_113, %c0_114, %c0_115] : memref<4x1x8xf32, #tpu.memory_space<vmem>>, vector<1x1x8xf32>
    %157 = vector.shape_cast %156 : vector<1x1x8xf32> to vector<1x8xf32>
    %158 = vector.broadcast %157 : vector<1x8xf32> to vector<8x8xf32>
    %159 = arith.addf %155, %158 : vector<8x8xf32>
    %160 = arith.truncf %145 : vector<8x8xf32> to vector<8x8xbf16>
    %161 = arith.truncf %152 : vector<8x8xf32> to vector<8x8xbf16>
    %cst_116 = arith.constant dense<0.000000e+00> : vector<8x8xf32>
    %162 = tpu.matmul %160, %161, %cst_116 {dimension_numbers = #tpu.dot_dimension_numbers<[1], [1], [0], [0], [0, 0, 1, 0], [], []>} : vector<8x8xbf16>, vector<8x8xbf16>, vector<8x8xf32> -> vector<8x8xf32>
    %cst_117 = arith.constant 0.353553385 : f32
    %163 = vector.broadcast %cst_117 : f32 to vector<8x8xf32>
    %164 = arith.mulf %162, %163 : vector<8x8xf32>
    %cst_118 = arith.constant dense<0xFF800000> : vector<8xf32>
    %165 = vector.multi_reduction <maximumf>, %164, %cst_118 [1] : vector<8x8xf32> to vector<8xf32>
    %166 = vector.shape_cast %165 : vector<8xf32> to vector<8x1xf32>
    %167 = vector.broadcast %166 : vector<8x1xf32> to vector<8x8xf32>
    %168 = arith.subf %164, %167 : vector<8x8xf32>
    %169 = math.exp %168 : vector<8x8xf32>
    %cst_119 = arith.constant dense<0.000000e+00> : vector<8xf32>
    %170 = vector.multi_reduction <add>, %169, %cst_119 [1] : vector<8x8xf32> to vector<8xf32>
    %171 = vector.shape_cast %170 : vector<8xf32> to vector<8x1xf32>
    %172 = tpu.reciprocal %171 {approx = true} : vector<8x1xf32> -> vector<8x1xf32>
    %173 = vector.broadcast %172 : vector<8x1xf32> to vector<8x8xf32>
    %174 = arith.mulf %169, %173 : vector<8x8xf32>
    %175 = arith.truncf %174 : vector<8x8xf32> to vector<8x8xbf16>
    %176 = arith.truncf %159 : vector<8x8xf32> to vector<8x8xbf16>
    %cst_120 = arith.constant dense<0.000000e+00> : vector<8x8xf32>
    %177 = tpu.matmul %175, %176, %cst_120 {dimension_numbers = #tpu.dot_dimension_numbers<[1], [0], [0], [1], [0, 0, 1, 1], [], []>} : vector<8x8xbf16>, vector<8x8xbf16>, vector<8x8xf32> -> vector<8x8xf32>
    %178 = arith.truncf %177 : vector<8x8xf32> to vector<8x8xbf16>
    %c3_121 = arith.constant 3 : index
    %c0_122 = arith.constant 0 : index
    %c0_123 = arith.constant 0 : index
    %179 = vector.load %arg10[%c3_121, %c0_122, %c0_123] : memref<4x8x32xbf16, #tpu.memory_space<vmem>>, vector<1x8x32xbf16>
    %180 = vector.shape_cast %179 : vector<1x8x32xbf16> to vector<8x32xbf16>
    %cst_124 = arith.constant dense<0.000000e+00> : vector<8x32xf32>
    %181 = tpu.matmul %178, %180, %cst_124 {dimension_numbers = #tpu.dot_dimension_numbers<[1], [0], [0], [1], [0, 0, 1, 1], [], []>} : vector<8x8xbf16>, vector<8x32xbf16>, vector<8x32xf32> -> vector<8x32xf32>
    %182 = arith.addf %138, %181 : vector<8x32xf32>
    %c0_125 = arith.constant 0 : index
    %c0_126 = arith.constant 0 : index
    %183 = vector.load %arg11[%c0_125, %c0_126] : memref<1x32xf32, #tpu.memory_space<vmem>>, vector<1x32xf32>
    %184 = vector.broadcast %183 : vector<1x32xf32> to vector<8x32xf32>
    %185 = arith.addf %182, %184 : vector<8x32xf32>
    %c0_127 = arith.constant 0 : index
    %c0_128 = arith.constant 0 : index
    %c0_129 = arith.constant 0 : index
    %186 = vector.load %arg12[%c0_127, %c0_128, %c0_129] : memref<1x8x32xf32, #tpu.memory_space<vmem>>, vector<1x8x32xf32>
    %187 = vector.shape_cast %186 : vector<1x8x32xf32> to vector<8x32xf32>
    %188 = vector.shape_cast %185 : vector<8x32xf32> to vector<1x8x32xf32>
    tpu.vector_store %arg12[%c0_127, %c0_128, %c0_129], %188 {strides = array<i32>} : memref<1x8x32xf32, #tpu.memory_space<vmem>>, vector<1x8x32xf32>,
    return
  }
  func.func @transform_0(%arg0: i32) -> (i32, i32, i32) {
    %c0_i32 = arith.constant 0 : i32
    %c0_i32_0 = arith.constant 0 : i32
    %c0_i32_1 = arith.constant 0 : i32
    return %arg0, %c0_i32, %c0_i32_0 : i32, i32, i32
  }
  func.func @transform_1(%arg0: i32) -> (i32, i32, i32) {
    %c0_i32 = arith.constant 0 : i32
    %c0_i32_0 = arith.constant 0 : i32
    %c0_i32_1 = arith.constant 0 : i32
    return %arg0, %c0_i32, %c0_i32_0 : i32, i32, i32
  }
  func.func @transform_2(%arg0: i32) -> (i32, i32, i32) {
    %c0_i32 = arith.constant 0 : i32
    %c0_i32_0 = arith.constant 0 : i32
    %c0_i32_1 = arith.constant 0 : i32
    return %arg0, %c0_i32, %c0_i32_0 : i32, i32, i32
  }
  func.func @transform_3(%arg0: i32) -> (i32, i32, i32) {
    %c0_i32 = arith.constant 0 : i32
    %c0_i32_0 = arith.constant 0 : i32
    %c0_i32_1 = arith.constant 0 : i32
    %c0_i32_2 = arith.constant 0 : i32
    return %c0_i32, %c0_i32_0, %c0_i32_1 : i32, i32, i32
  }
  func.func @transform_4(%arg0: i32) -> (i32, i32, i32) {
    %c0_i32 = arith.constant 0 : i32
    %c0_i32_0 = arith.constant 0 : i32
    %c0_i32_1 = arith.constant 0 : i32
    %c0_i32_2 = arith.constant 0 : i32
    return %c0_i32, %c0_i32_0, %c0_i32_1 : i32, i32, i32
  }
  func.func @transform_5(%arg0: i32) -> (i32, i32, i32) {
    %c0_i32 = arith.constant 0 : i32
    %c0_i32_0 = arith.constant 0 : i32
    %c0_i32_1 = arith.constant 0 : i32
    %c0_i32_2 = arith.constant 0 : i32
    return %c0_i32, %c0_i32_0, %c0_i32_1 : i32, i32, i32
  }
  func.func @transform_6(%arg0: i32) -> (i32, i32, i32) {
    %c0_i32 = arith.constant 0 : i32
    %c0_i32_0 = arith.constant 0 : i32
    %c0_i32_1 = arith.constant 0 : i32
    %c0_i32_2 = arith.constant 0 : i32
    return %c0_i32, %c0_i32_0, %c0_i32_1 : i32, i32, i32
  }
  func.func @transform_7(%arg0: i32) -> (i32, i32, i32) {
    %c0_i32 = arith.constant 0 : i32
    %c0_i32_0 = arith.constant 0 : i32
    %c0_i32_1 = arith.constant 0 : i32
    %c0_i32_2 = arith.constant 0 : i32
    return %c0_i32, %c0_i32_0, %c0_i32_1 : i32, i32, i32
  }
  func.func @transform_8(%arg0: i32) -> (i32, i32, i32) {
    %c0_i32 = arith.constant 0 : i32
    %c0_i32_0 = arith.constant 0 : i32
    %c0_i32_1 = arith.constant 0 : i32
    %c0_i32_2 = arith.constant 0 : i32
    return %c0_i32, %c0_i32_0, %c0_i32_1 : i32, i32, i32
  }
  func.func @transform_9(%arg0: i32) -> (i32, i32, i32) {
    %c0_i32 = arith.constant 0 : i32
    %c0_i32_0 = arith.constant 0 : i32
    %c0_i32_1 = arith.constant 0 : i32
    %c0_i32_2 = arith.constant 0 : i32
    return %c0_i32, %c0_i32_0, %c0_i32_1 : i32, i32, i32
  }
  func.func @transform_10(%arg0: i32) -> (i32, i32) {
    %c0_i32 = arith.constant 0 : i32
    %c0_i32_0 = arith.constant 0 : i32
    %c0_i32_1 = arith.constant 0 : i32
    return %c0_i32, %c0_i32_0 : i32, i32
  }
  func.func @transform_11(%arg0: i32) -> (i32, i32, i32) {
    %c0_i32 = arith.constant 0 : i32
    %c0_i32_0 = arith.constant 0 : i32
    %c0_i32_1 = arith.constant 0 : i32
    return %arg0, %c0_i32, %c0_i32_0 : i32, i32, i32
  }
}

</mosaic_0001>

<llo_original>
// kernel: tpu_custom_call.1
$region0: #{tpu_custom_call.1}
  #allocation0 [shape = 'u32[]', space=smem, size = 0x4, offset = 0x4, fixed_abs, tag = 'smem constant byte address 0x4 - core index']
  #allocation1 [shape = 'u32[72,128]{1,0:T(1,128)}', space=vmem, size = 0x9000, scoped, tag = 'internal scratch']
  %s0 = inlined_call_operand.vmem [shape: bf16[1,8,32], index: 0, kind: input, shape index: {}]
  %s1 = inlined_call_operand.vmem [shape: bf16[1,8,32], index: 1, kind: input, shape index: {}]
  %s2 = inlined_call_operand.vmem [shape: bf16[1,8,32], index: 2, kind: input, shape index: {}]
  %s3 = inlined_call_operand.vmem [shape: bf16[4,32,8], index: 3, kind: input, shape index: {}]
  %s4 = inlined_call_operand.vmem [shape: f32[4,1,8], index: 4, kind: input, shape index: {}]
  %s5 = inlined_call_operand.vmem [shape: bf16[4,32,8], index: 5, kind: input, shape index: {}]
  %s6 = inlined_call_operand.vmem [shape: f32[4,1,8], index: 6, kind: input, shape index: {}]
  %s7 = inlined_call_operand.vmem [shape: bf16[4,32,8], index: 7, kind: input, shape index: {}]
  %s8 = inlined_call_operand.vmem [shape: f32[4,1,8], index: 8, kind: input, shape index: {}]
  %s9 = inlined_call_operand.vmem [shape: bf16[4,8,32], index: 9, kind: input, shape index: {}]
  %s10 = inlined_call_operand.vmem [shape: f32[1,32], index: 10, kind: input, shape index: {}]
  %s11 = inlined_call_operand.hbm [shape: f32[1,8,32], index: 11, kind: output, shape index: {}]
  %s12 = sld [smem:[#allocation0]]
  $region54: #{tpu_custom_call.1} parent=0
    _
  %s14 = ssub.s32 1, %s12
  %s15 = scalar_select 0, %s14, %s12
  $region1: #{tpu_custom_call.1} parent=0
    #allocation2 [shape = 'u8[4096]{0}', space=vmem, size = 0x1000, scoped, tag = 'output window, operand 0, single buffered']
    #allocation3 [shape = 's32[1]{0}', space=sflag, size = 0x4, scoped, tag = 'scoped memory for tpu_custom_call.1']
    %16 = vsyncpa [#allocation3], 0
    // Predicated region
    $region2: #{tpu_custom_call.1} parent=1 // pred_check
      _
    $region3: #{tpu_custom_call.1} parent=1 // pred_check_branch
      %18 = sbr.rel (0) target = $region5
    $region4: #{tpu_custom_call.1} parent=1 // pred_region
      _
    $region5: #{tpu_custom_call.1} parent=1 // pred_fallthru
      _
    // Predicated region
    $region6: #{tpu_custom_call.1} parent=1 // pred_check
      _
    $region7: #{tpu_custom_call.1} parent=1 // pred_check_branch
      %20 = sbr.rel (0) target = $region9
    $region8: #{tpu_custom_call.1} parent=1 // pred_region
      _
    $region9: #{tpu_custom_call.1} parent=1 // pred_fallthru
      _
    // Predicated region
    $region10: #{tpu_custom_call.1} parent=1 // pred_check
      _
    $region11: #{tpu_custom_call.1} parent=1 // pred_check_branch
      %22 = sbr.rel (0) target = $region13
    $region12: #{tpu_custom_call.1} parent=1 // pred_region
      _
    $region13: #{tpu_custom_call.1} parent=1 // pred_fallthru
      _
    // Predicated region
    $region14: #{tpu_custom_call.1} parent=1 // pred_check
      _
    $region15: #{tpu_custom_call.1} parent=1 // pred_check_branch
      %24 = sbr.rel (0) target = $region17
    $region16: #{tpu_custom_call.1} parent=1 // pred_region
      _
    $region17: #{tpu_custom_call.1} parent=1 // pred_fallthru
      _
    // Predicated region
    $region18: #{tpu_custom_call.1} parent=1 // pred_check
      _
    $region19: #{tpu_custom_call.1} parent=1 // pred_check_branch
      %26 = sbr.rel (0) target = $region21
    $region20: #{tpu_custom_call.1} parent=1 // pred_region
      _
    $region21: #{tpu_custom_call.1} parent=1 // pred_fallthru
      _
    // Predicated region
    $region22: #{tpu_custom_call.1} parent=1 // pred_check
      _
    $region23: #{tpu_custom_call.1} parent=1 // pred_check_branch
      %28 = sbr.rel (0) target = $region25
    $region24: #{tpu_custom_call.1} parent=1 // pred_region
      _
    $region25: #{tpu_custom_call.1} parent=1 // pred_fallthru
      _
    // Predicated region
    $region26: #{tpu_custom_call.1} parent=1 // pred_check
      _
    $region27: #{tpu_custom_call.1} parent=1 // pred_check_branch
      %30 = sbr.rel (0) target = $region29
    $region28: #{tpu_custom_call.1} parent=1 // pred_region
      _
    $region29: #{tpu_custom_call.1} parent=1 // pred_fallthru
      _
    // Predicated region
    $region30: #{tpu_custom_call.1} parent=1 // pred_check
      _
    $region31: #{tpu_custom_call.1} parent=1 // pred_check_branch
      %32 = sbr.rel (0) target = $region33
    $region32: #{tpu_custom_call.1} parent=1 // pred_region
      _
    $region33: #{tpu_custom_call.1} parent=1 // pred_fallthru
      _
    // Predicated region
    $region34: #{tpu_custom_call.1} parent=1 // pred_check
      _
    $region35: #{tpu_custom_call.1} parent=1 // pred_check_branch
      %34 = sbr.rel (0) target = $region37
    $region36: #{tpu_custom_call.1} parent=1 // pred_region
      _
    $region37: #{tpu_custom_call.1} parent=1 // pred_fallthru
      _
    // Predicated region
    $region38: #{tpu_custom_call.1} parent=1 // pred_check
      _
    $region39: #{tpu_custom_call.1} parent=1 // pred_check_branch
      %36 = sbr.rel (0) target = $region41
    $region40: #{tpu_custom_call.1} parent=1 // pred_region
      _
    $region41: #{tpu_custom_call.1} parent=1 // pred_fallthru
      _
    // Predicated region
    $region42: #{tpu_custom_call.1} parent=1 // pred_check
      _
    $region43: #{tpu_custom_call.1} parent=1 // pred_check_branch
      %38 = sbr.rel (0) target = $region45
    $region44: #{tpu_custom_call.1} parent=1 // pred_region
      _
    $region45: #{tpu_custom_call.1} parent=1 // pred_fallthru
      _
    %v40 = vld [vmem:[%s0] sm:$0xf]
    %v41 = vld [vmem:[%s1] sm:$0xf]
    %v42 = vld [vmem:[%s2] sm:$0xf]
    %v43 = vld [vmem:[%s3] sm:$0xf]
    %v44 = vld [vmem:[%s3 + $0x4] sm:$0xf]
    %v45 = vld [vmem:[%s3 + $0x8] sm:$0xf]
    %v46 = vld [vmem:[%s3 + $0xc] sm:$0xf]
    %v47 = vld [vmem:[%s4] sm:$0x1]
    %v49 = vperm.slane %v47, 0
    %v55 = vunpack.c.l.b16 %v43
    %v56 = vunpack.c.l.b16 %v44
    %v57 = vunpack.c.l.b16 %v45
    %v58 = vunpack.c.l.b16 %v46
    %v59 = vpack.c.b16 %v56, %v55
    %v60 = vpack.c.b16 %v58, %v57
    %vm63 = vcmask 261120
    %v65 = vsel %vm63, %v40, 0
    %67 = vmatpush.bf16.msra.mxu0 0
    %68 = vmatpush.bf16.msra.mxu0 0
    %69 = vmatpush.bf16.msra.mxu0 0
    %70 = vmatpush.bf16.msra.mxu0 0
    %71 = vmatpush.bf16.msra.mxu0 0
    %72 = vmatpush.bf16.msra.mxu0 0
    %73 = vmatpush.bf16.msra.mxu0 %v60
    %74 = vmatpush.bf16.msra.mxu0 %v59
    %75 = vmatmul.bf16.gmra.mxu0 %v65
    %v76 = vpop.f32.mrf.mxu0
    %v77 = vadd.f32 %v49, %v76
    %v78 = vpop.f32.mrf.mxu0
    %79 = vdwg.mxu0
    %v80 = vld [vmem:[%s5] sm:$0xf]
    %v81 = vld [vmem:[%s5 + $0x4] sm:$0xf]
    %v82 = vld [vmem:[%s5 + $0x8] sm:$0xf]
    %v83 = vld [vmem:[%s5 + $0xc] sm:$0xf]
    %v84 = vld [vmem:[%s6] sm:$0x1]
    %v86 = vperm.slane %v84, 0
    %v92 = vunpack.c.l.b16 %v80
    %v93 = vunpack.c.l.b16 %v81
    %v94 = vunpack.c.l.b16 %v82
    %v95 = vunpack.c.l.b16 %v83
    %v96 = vpack.c.b16 %v93, %v92
    %v97 = vpack.c.b16 %v95, %v94
    %v101 = vsel %vm63, %v41, 0
    %103 = vmatpush.bf16.msra.mxu0 0
    %104 = vmatpush.bf16.msra.mxu0 0
    %105 = vmatpush.bf16.msra.mxu0 0
    %106 = vmatpush.bf16.msra.mxu0 0
    %107 = vmatpush.bf16.msra.mxu0 0
    %108 = vmatpush.bf16.msra.mxu0 0
    %109 = vmatpush.bf16.msra.mxu0 %v97
    %110 = vmatpush.bf16.msra.mxu0 %v96
    %111 = vmatmul.bf16.gmra.mxu0 %v101
    %v112 = vpop.f32.mrf.mxu0
    %v113 = vadd.f32 %v86, %v112
    %v114 = vpop.f32.mrf.mxu0
    %115 = vdwg.mxu0
    %v116 = vld [vmem:[%s7] sm:$0xf]
    %v117 = vld [vmem:[%s7 + $0x4] sm:$0xf]
    %v118 = vld [vmem:[%s7 + $0x8] sm:$0xf]
    %v119 = vld [vmem:[%s7 + $0xc] sm:$0xf]
    %v120 = vld [vmem:[%s8] sm:$0x1]
    %v122 = vperm.slane %v120, 0
    %v128 = vunpack.c.l.b16 %v116
    %v129 = vunpack.c.l.b16 %v117
    %v130 = vunpack.c.l.b16 %v118
    %v131 = vunpack.c.l.b16 %v119
    %v132 = vpack.c.b16 %v129, %v128
    %v133 = vpack.c.b16 %v131, %v130
    %v137 = vsel %vm63, %v42, 0
    %139 = vmatpush.bf16.msra.mxu0 0
    %140 = vmatpush.bf16.msra.mxu0 0
    %141 = vmatpush.bf16.msra.mxu0 0
    %142 = vmatpush.bf16.msra.mxu0 0
    %143 = vmatpush.bf16.msra.mxu0 0
    %144 = vmatpush.bf16.msra.mxu0 0
    %145 = vmatpush.bf16.msra.mxu0 %v133
    %146 = vmatpush.bf16.msra.mxu0 %v132
    %147 = vmatmul.bf16.gmra.mxu0 %v137
    %v148 = vpop.f32.mrf.mxu0
    %v149 = vadd.f32 %v122, %v148
    %v150 = vpop.f32.mrf.mxu0
    %151 = vdwg.mxu0
    %v152 = vpack.c.bf16 %v77, %v77
    %v153 = vpack.c.bf16 %v113, %v113
    %vm154 = vcmask 64512
    %v156 = vsel %vm154, %v152, 0
    %v159 = vsel %vm154, %v153, 0
    %161 = vmatpush.bf16.xpose.msra.mxu0 0
    %162 = vmatpush.bf16.xpose.msra.mxu0 0
    %163 = vmatpush.bf16.xpose.msra.mxu0 0
    %164 = vmatpush.bf16.xpose.msra.mxu0 0
    %165 = vmatpush.bf16.xpose.msra.mxu0 0
    %166 = vmatpush.bf16.xpose.msra.mxu0 0
    %167 = vmatpush.bf16.xpose.msra.mxu0 0
    %168 = vmatpush.bf16.xpose.msra.mxu0 %v159
    %169 = vmatmul.bf16.gmra.mxu0 %v156
    %v170 = vpop.f32.mrf.mxu0
    %v171 = vadd.f32 0.0, %v170
    %v172 = vpop.f32.mrf.mxu0
    %173 = vdwg.mxu0
    %v174 = vmul.f32 %v171, 0.35355338
    %v175 = vsel %vm154, %v174, -inf
    %176 = vmax.xlane.f32.xlu0 %v175
    %v177 = vpop.xlane.xlu0 %176
    %v178 = vsub.f32 %v174, %v177
    %v179 = vmul.f32 %v178, 1.442695
    %v180 = vpow.pop %v179
    %v181 = vsel %vm154, %v180, 0.0
    %182 = vadd.xlane.f32.xlu0 %v181
    %v183 = vpop.xlane.xlu0 %182
    %v184 = vrcp.pop %v183
    %v185 = vmul.f32 %v180, %v184
    %v186 = vpack.c.bf16 %v185, %v185
    %v187 = vpack.c.bf16 %v149, %v149
    %v189 = vsel %vm154, %v186, 0
    %vm191 = vcmask 1043456
    %v193 = vsel %vm191, %v187, 0
    %195 = vmatpush.bf16.msra.mxu0 0
    %196 = vmatpush.bf16.msra.mxu0 0
    %197 = vmatpush.bf16.msra.mxu0 0
    %198 = vmatpush.bf16.msra.mxu0 0
    %199 = vmatpush.bf16.msra.mxu0 0
    %200 = vmatpush.bf16.msra.mxu0 0
    %201 = vmatpush.bf16.msra.mxu0 0
    %202 = vmatpush.bf16.msra.mxu0 %v193
    %203 = vmatmul.bf16.gmra.mxu0 %v189
    %v204 = vpop.f32.mrf.mxu0
    %v205 = vadd.f32 0.0, %v204
    %v206 = vpop.f32.mrf.mxu0
    %207 = vdwg.mxu0
    %v208 = vpack.c.bf16 %v205, %v205
    %v209 = vld [vmem:[%s9] sm:$0xf]
    %s210 = scalar_lea.vmem %s3, 16
    %v211 = vld [vmem:[%s210] sm:$0xf]
    %v212 = vld [vmem:[%s210 + $0x4] sm:$0xf]
    %v213 = vld [vmem:[%s210 + $0x8] sm:$0xf]
    %v214 = vld [vmem:[%s210 + $0xc] sm:$0xf]
    %s215 = scalar_lea.vmem %s4, 1
    %v216 = vld [vmem:[%s215] sm:$0x1]
    %v218 = vperm.slane %v216, 0
    %v224 = vunpack.c.l.b16 %v211
    %v225 = vunpack.c.l.b16 %v212
    %v226 = vunpack.c.l.b16 %v213
    %v227 = vunpack.c.l.b16 %v214
    %v228 = vpack.c.b16 %v225, %v224
    %v229 = vpack.c.b16 %v227, %v226
    %232 = vmatpush.bf16.msra.mxu0 0
    %233 = vmatpush.bf16.msra.mxu0 0
    %234 = vmatpush.bf16.msra.mxu0 0
    %235 = vmatpush.bf16.msra.mxu0 0
    %236 = vmatpush.bf16.msra.mxu0 0
    %237 = vmatpush.bf16.msra.mxu0 0
    %238 = vmatpush.bf16.msra.mxu0 %v229
    %239 = vmatpush.bf16.msra.mxu0 %v228
    %240 = vmatmul.bf16.gmra.mxu0 %v65
    %v241 = vpop.f32.mrf.mxu0
    %v242 = vadd.f32 %v218, %v241
    %v243 = vpop.f32.mrf.mxu0
    %244 = vdwg.mxu0
    %s245 = scalar_lea.vmem %s5, 16
    %v246 = vld [vmem:[%s245] sm:$0xf]
    %v247 = vld [vmem:[%s245 + $0x4] sm:$0xf]
    %v248 = vld [vmem:[%s245 + $0x8] sm:$0xf]
    %v249 = vld [vmem:[%s245 + $0xc] sm:$0xf]
    %s250 = scalar_lea.vmem %s6, 1
    %v251 = vld [vmem:[%s250] sm:$0x1]
    %v253 = vperm.slane %v251, 0
    %v259 = vunpack.c.l.b16 %v246
    %v260 = vunpack.c.l.b16 %v247
    %v261 = vunpack.c.l.b16 %v248
    %v262 = vunpack.c.l.b16 %v249
    %v263 = vpack.c.b16 %v260, %v259
    %v264 = vpack.c.b16 %v262, %v261
    %267 = vmatpush.bf16.msra.mxu0 0
    %268 = vmatpush.bf16.msra.mxu0 0
    %269 = vmatpush.bf16.msra.mxu0 0
    %270 = vmatpush.bf16.msra.mxu0 0
    %271 = vmatpush.bf16.msra.mxu0 0
    %272 = vmatpush.bf16.msra.mxu0 0
    %273 = vmatpush.bf16.msra.mxu0 %v264
    %274 = vmatpush.bf16.msra.mxu0 %v263
    %275 = vmatmul.bf16.gmra.mxu0 %v101
    %v276 = vpop.f32.mrf.mxu0
    %v277 = vadd.f32 %v253, %v276
    %v278 = vpop.f32.mrf.mxu0
    %279 = vdwg.mxu0
    %s280 = scalar_lea.vmem %s7, 16
    %v281 = vld [vmem:[%s280] sm:$0xf]
    %v282 = vld [vmem:[%s280 + $0x4] sm:$0xf]
    %v283 = vld [vmem:[%s280 + $0x8] sm:$0xf]
    %v284 = vld [vmem:[%s280 + $0xc] sm:$0xf]
    %s285 = scalar_lea.vmem %s8, 1
    %v286 = vld [vmem:[%s285] sm:$0x1]
    %v288 = vperm.slane %v286, 0
    %v294 = vunpack.c.l.b16 %v281
    %v295 = vunpack.c.l.b16 %v282
    %v296 = vunpack.c.l.b16 %v283
    %v297 = vunpack.c.l.b16 %v284
    %v298 = vpack.c.b16 %v295, %v294
    %v299 = vpack.c.b16 %v297, %v296
    %302 = vmatpush.bf16.msra.mxu0 0
    %303 = vmatpush.bf16.msra.mxu0 0
    %304 = vmatpush.bf16.msra.mxu0 0
    %305 = vmatpush.bf16.msra.mxu0 0
    %306 = vmatpush.bf16.msra.mxu0 0
    %307 = vmatpush.bf16.msra.mxu0 0
    %308 = vmatpush.bf16.msra.mxu0 %v299
    %309 = vmatpush.bf16.msra.mxu0 %v298
    %310 = vmatmul.bf16.gmra.mxu0 %v137
    %v311 = vpop.f32.mrf.mxu0
    %v312 = vadd.f32 %v288, %v311
    %v313 = vpop.f32.mrf.mxu0
    %314 = vdwg.mxu0
    %v315 = vpack.c.bf16 %v242, %v242
    %v316 = vpack.c.bf16 %v277, %v277
    %v318 = vsel %vm154, %v315, 0
    %v321 = vsel %vm154, %v316, 0
    %323 = vmatpush.bf16.xpose.msra.mxu0 0
    %324 = vmatpush.bf16.xpose.msra.mxu0 0
    %325 = vmatpush.bf16.xpose.msra.mxu0 0
    %326 = vmatpush.bf16.xpose.msra.mxu0 0
    %327 = vmatpush.bf16.xpose.msra.mxu0 0
    %328 = vmatpush.bf16.xpose.msra.mxu0 0
    %329 = vmatpush.bf16.xpose.msra.mxu0 0
    %330 = vmatpush.bf16.xpose.msra.mxu0 %v321
    %331 = vmatmul.bf16.gmra.mxu0 %v318
    %v332 = vpop.f32.mrf.mxu0
    %v333 = vadd.f32 0.0, %v332
    %v334 = vpop.f32.mrf.mxu0
    %335 = vdwg.mxu0
    %v336 = vmul.f32 %v333, 0.35355338
    %v337 = vsel %vm154, %v336, -inf
    %338 = vmax.xlane.f32.xlu0 %v337
    %v339 = vpop.xlane.xlu0 %338
    %v340 = vsub.f32 %v336, %v339
    %v341 = vmul.f32 %v340, 1.442695
    %v342 = vpow.pop %v341
    %v343 = vsel %vm154, %v342, 0.0
    %344 = vadd.xlane.f32.xlu0 %v343
    %v345 = vpop.xlane.xlu0 %344
    %v346 = vrcp.pop %v345
    %v347 = vmul.f32 %v342, %v346
    %v348 = vpack.c.bf16 %v347, %v347
    %v349 = vpack.c.bf16 %v312, %v312
    %v351 = vsel %vm154, %v348, 0
    %v354 = vsel %vm191, %v349, 0
    %356 = vmatpush.bf16.msra.mxu0 0
    %357 = vmatpush.bf16.msra.mxu0 0
    %358 = vmatpush.bf16.msra.mxu0 0
    %359 = vmatpush.bf16.msra.mxu0 0
    %360 = vmatpush.bf16.msra.mxu0 0
    %361 = vmatpush.bf16.msra.mxu0 0
    %362 = vmatpush.bf16.msra.mxu0 0
    %363 = vmatpush.bf16.msra.mxu0 %v354
    %364 = vmatmul.bf16.gmra.mxu0 %v351
    %v365 = vpop.f32.mrf.mxu0
    %v366 = vadd.f32 0.0, %v365
    %v367 = vpop.f32.mrf.mxu0
    %368 = vdwg.mxu0
    %v369 = vpack.c.bf16 %v366, %v366
    %s370 = scalar_lea.vmem %s9, 4
    %v371 = vld [vmem:[%s370] sm:$0xf]
    %v373 = vsel %vm154, %v369, 0
    %v376 = vsel %vm191, %v371, 0
    %378 = vmatpush.bf16.msra.mxu0 0
    %379 = vmatpush.bf16.msra.mxu0 0
    %380 = vmatpush.bf16.msra.mxu0 0
    %381 = vmatpush.bf16.msra.mxu0 0
    %382 = vmatpush.bf16.msra.mxu0 0
    %383 = vmatpush.bf16.msra.mxu0 0
    %384 = vmatpush.bf16.msra.mxu0 0
    %385 = vmatpush.bf16.msra.mxu0 %v376
    %386 = vmatmul.bf16.gmra.mxu0 %v373
    %v387 = vpop.f32.mrf.mxu0
    %v388 = vadd.f32 0.0, %v387
    %v389 = vpop.f32.mrf.mxu0
    %390 = vdwg.mxu0
    %v392 = vsel %vm154, %v208, 0
    %v395 = vsel %vm191, %v209, 0
    %397 = vmatpush.bf16.msra.mxu0 0
    %398 = vmatpush.bf16.msra.mxu0 0
    %399 = vmatpush.bf16.msra.mxu0 0
    %400 = vmatpush.bf16.msra.mxu0 0
    %401 = vmatpush.bf16.msra.mxu0 0
    %402 = vmatpush.bf16.msra.mxu0 0
    %403 = vmatpush.bf16.msra.mxu0 0
    %404 = vmatpush.bf16.msra.mxu0 %v395
    %405 = vmatmul.bf16.gmra.mxu0 %v392
    %v406 = vpop.f32.mrf.mxu0
    %v407 = vadd.f32 %v388, %v406
    %v408 = vpop.f32.mrf.mxu0
    %409 = vdwg.mxu0
    %s410 = scalar_lea.vmem %s3, 32
    %v411 = vld [vmem:[%s410] sm:$0xf]
    %v412 = vld [vmem:[%s410 + $0x4] sm:$0xf]
    %v413 = vld [vmem:[%s410 + $0x8] sm:$0xf]
    %v414 = vld [vmem:[%s410 + $0xc] sm:$0xf]
    %s415 = scalar_lea.vmem %s4, 2
    %v416 = vld [vmem:[%s415] sm:$0x1]
    %v418 = vperm.slane %v416, 0
    %v424 = vunpack.c.l.b16 %v411
    %v425 = vunpack.c.l.b16 %v412
    %v426 = vunpack.c.l.b16 %v413
    %v427 = vunpack.c.l.b16 %v414
    %v428 = vpack.c.b16 %v425, %v424
    %v429 = vpack.c.b16 %v427, %v426
    %432 = vmatpush.bf16.msra.mxu0 0
    %433 = vmatpush.bf16.msra.mxu0 0
    %434 = vmatpush.bf16.msra.mxu0 0
    %435 = vmatpush.bf16.msra.mxu0 0
    %436 = vmatpush.bf16.msra.mxu0 0
    %437 = vmatpush.bf16.msra.mxu0 0
    %438 = vmatpush.bf16.msra.mxu0 %v429
    %439 = vmatpush.bf16.msra.mxu0 %v428
    %440 = vmatmul.bf16.gmra.mxu0 %v65
    %v441 = vpop.f32.mrf.mxu0
    %v442 = vadd.f32 %v418, %v441
    %v443 = vpop.f32.mrf.mxu0
    %444 = vdwg.mxu0
    %s445 = scalar_lea.vmem %s5, 32
    %v446 = vld [vmem:[%s445] sm:$0xf]
    %v447 = vld [vmem:[%s445 + $0x4] sm:$0xf]
    %v448 = vld [vmem:[%s445 + $0x8] sm:$0xf]
    %v449 = vld [vmem:[%s445 + $0xc] sm:$0xf]
    %s450 = scalar_lea.vmem %s6, 2
    %v451 = vld [vmem:[%s450] sm:$0x1]
    %v453 = vperm.slane %v451, 0
    %v459 = vunpack.c.l.b16 %v446
    %v460 = vunpack.c.l.b16 %v447
    %v461 = vunpack.c.l.b16 %v448
    %v462 = vunpack.c.l.b16 %v449
    %v463 = vpack.c.b16 %v460, %v459
    %v464 = vpack.c.b16 %v462, %v461
    %467 = vmatpush.bf16.msra.mxu0 0
    %468 = vmatpush.bf16.msra.mxu0 0
    %469 = vmatpush.bf16.msra.mxu0 0
    %470 = vmatpush.bf16.msra.mxu0 0
    %471 = vmatpush.bf16.msra.mxu0 0
    %472 = vmatpush.bf16.msra.mxu0 0
    %473 = vmatpush.bf16.msra.mxu0 %v464
    %474 = vmatpush.bf16.msra.mxu0 %v463
    %475 = vmatmul.bf16.gmra.mxu0 %v101
    %v476 = vpop.f32.mrf.mxu0
    %v477 = vadd.f32 %v453, %v476
    %v478 = vpop.f32.mrf.mxu0
    %479 = vdwg.mxu0
    %s480 = scalar_lea.vmem %s7, 32
    %v481 = vld [vmem:[%s480] sm:$0xf]
    %v482 = vld [vmem:[%s480 + $0x4] sm:$0xf]
    %v483 = vld [vmem:[%s480 + $0x8] sm:$0xf]
    %v484 = vld [vmem:[%s480 + $0xc] sm:$0xf]
    %s485 = scalar_lea.vmem %s8, 2
    %v486 = vld [vmem:[%s485] sm:$0x1]
    %v488 = vperm.slane %v486, 0
    %v494 = vunpack.c.l.b16 %v481
    %v495 = vunpack.c.l.b16 %v482
    %v496 = vunpack.c.l.b16 %v483
    %v497 = vunpack.c.l.b16 %v484
    %v498 = vpack.c.b16 %v495, %v494
    %v499 = vpack.c.b16 %v497, %v496
    %502 = vmatpush.bf16.msra.mxu0 0
    %503 = vmatpush.bf16.msra.mxu0 0
    %504 = vmatpush.bf16.msra.mxu0 0
    %505 = vmatpush.bf16.msra.mxu0 0
    %506 = vmatpush.bf16.msra.mxu0 0
    %507 = vmatpush.bf16.msra.mxu0 0
    %508 = vmatpush.bf16.msra.mxu0 %v499
    %509 = vmatpush.bf16.msra.mxu0 %v498
    %510 = vmatmul.bf16.gmra.mxu0 %v137
    %v511 = vpop.f32.mrf.mxu0
    %v512 = vadd.f32 %v488, %v511
    %v513 = vpop.f32.mrf.mxu0
    %514 = vdwg.mxu0
    %v515 = vpack.c.bf16 %v442, %v442
    %v516 = vpack.c.bf16 %v477, %v477
    %v518 = vsel %vm154, %v515, 0
    %v521 = vsel %vm154, %v516, 0
    %523 = vmatpush.bf16.xpose.msra.mxu0 0
    %524 = vmatpush.bf16.xpose.msra.mxu0 0
    %525 = vmatpush.bf16.xpose.msra.mxu0 0
    %526 = vmatpush.bf16.xpose.msra.mxu0 0
    %527 = vmatpush.bf16.xpose.msra.mxu0 0
    %528 = vmatpush.bf16.xpose.msra.mxu0 0
    %529 = vmatpush.bf16.xpose.msra.mxu0 0
    %530 = vmatpush.bf16.xpose.msra.mxu0 %v521
    %531 = vmatmul.bf16.gmra.mxu0 %v518
    %v532 = vpop.f32.mrf.mxu0
    %v533 = vadd.f32 0.0, %v532
    %v534 = vpop.f32.mrf.mxu0
    %535 = vdwg.mxu0
    %v536 = vmul.f32 %v533, 0.35355338
    %v537 = vsel %vm154, %v536, -inf
    %538 = vmax.xlane.f32.xlu0 %v537
    %v539 = vpop.xlane.xlu0 %538
    %v540 = vsub.f32 %v536, %v539
    %v541 = vmul.f32 %v540, 1.442695
    %v542 = vpow.pop %v541
    %v543 = vsel %vm154, %v542, 0.0
    %544 = vadd.xlane.f32.xlu0 %v543
    %v545 = vpop.xlane.xlu0 %544
    %v546 = vrcp.pop %v545
    %v547 = vmul.f32 %v542, %v546
    %v548 = vpack.c.bf16 %v547, %v547
    %v549 = vpack.c.bf16 %v512, %v512
    %v551 = vsel %vm154, %v548, 0
    %v554 = vsel %vm191, %v549, 0
    %556 = vmatpush.bf16.msra.mxu0 0
    %557 = vmatpush.bf16.msra.mxu0 0
    %558 = vmatpush.bf16.msra.mxu0 0
    %559 = vmatpush.bf16.msra.mxu0 0
    %560 = vmatpush.bf16.msra.mxu0 0
    %561 = vmatpush.bf16.msra.mxu0 0
    %562 = vmatpush.bf16.msra.mxu0 0
    %563 = vmatpush.bf16.msra.mxu0 %v554
    %564 = vmatmul.bf16.gmra.mxu0 %v551
    %v565 = vpop.f32.mrf.mxu0
    %v566 = vadd.f32 0.0, %v565
    %v567 = vpop.f32.mrf.mxu0
    %568 = vdwg.mxu0
    %v569 = vpack.c.bf16 %v566, %v566
    %s570 = scalar_lea.vmem %s9, 8
    %v571 = vld [vmem:[%s570] sm:$0xf]
    %v573 = vsel %vm154, %v569, 0
    %v576 = vsel %vm191, %v571, 0
    %578 = vmatpush.bf16.msra.mxu0 0
    %579 = vmatpush.bf16.msra.mxu0 0
    %580 = vmatpush.bf16.msra.mxu0 0
    %581 = vmatpush.bf16.msra.mxu0 0
    %582 = vmatpush.bf16.msra.mxu0 0
    %583 = vmatpush.bf16.msra.mxu0 0
    %584 = vmatpush.bf16.msra.mxu0 0
    %585 = vmatpush.bf16.msra.mxu0 %v576
    %586 = vmatmul.bf16.gmra.mxu0 %v573
    %v587 = vpop.f32.mrf.mxu0
    %v588 = vadd.f32 0.0, %v587
    %v589 = vpop.f32.mrf.mxu0
    %590 = vdwg.mxu0
    %v591 = vadd.f32 %v407, %v588
    %s592 = scalar_lea.vmem %s3, 48
    %v593 = vld [vmem:[%s592] sm:$0xf]
    %v594 = vld [vmem:[%s592 + $0x4] sm:$0xf]
    %v595 = vld [vmem:[%s592 + $0x8] sm:$0xf]
    %v596 = vld [vmem:[%s592 + $0xc] sm:$0xf]
    %s597 = scalar_lea.vmem %s4, 3
    %v598 = vld [vmem:[%s597] sm:$0x1]
    %v600 = vperm.slane %v598, 0
    %v606 = vunpack.c.l.b16 %v593
    %v607 = vunpack.c.l.b16 %v594
    %v608 = vunpack.c.l.b16 %v595
    %v609 = vunpack.c.l.b16 %v596
    %v610 = vpack.c.b16 %v607, %v606
    %v611 = vpack.c.b16 %v609, %v608
    %614 = vmatpush.bf16.msra.mxu0 0
    %615 = vmatpush.bf16.msra.mxu0 0
    %616 = vmatpush.bf16.msra.mxu0 0
    %617 = vmatpush.bf16.msra.mxu0 0
    %618 = vmatpush.bf16.msra.mxu0 0
    %619 = vmatpush.bf16.msra.mxu0 0
    %620 = vmatpush.bf16.msra.mxu0 %v611
    %621 = vmatpush.bf16.msra.mxu0 %v610
    %622 = vmatmul.bf16.gmra.mxu0 %v65
    %v623 = vpop.f32.mrf.mxu0
    %v624 = vadd.f32 %v600, %v623
    %v625 = vpop.f32.mrf.mxu0
    %626 = vdwg.mxu0
    %s627 = scalar_lea.vmem %s5, 48
    %v628 = vld [vmem:[%s627] sm:$0xf]
    %v629 = vld [vmem:[%s627 + $0x4] sm:$0xf]
    %v630 = vld [vmem:[%s627 + $0x8] sm:$0xf]
    %v631 = vld [vmem:[%s627 + $0xc] sm:$0xf]
    %s632 = scalar_lea.vmem %s6, 3
    %v633 = vld [vmem:[%s632] sm:$0x1]
    %v635 = vperm.slane %v633, 0
    %v641 = vunpack.c.l.b16 %v628
    %v642 = vunpack.c.l.b16 %v629
    %v643 = vunpack.c.l.b16 %v630
    %v644 = vunpack.c.l.b16 %v631
    %v645 = vpack.c.b16 %v642, %v641
    %v646 = vpack.c.b16 %v644, %v643
    %649 = vmatpush.bf16.msra.mxu0 0
    %650 = vmatpush.bf16.msra.mxu0 0
    %651 = vmatpush.bf16.msra.mxu0 0
    %652 = vmatpush.bf16.msra.mxu0 0
    %653 = vmatpush.bf16.msra.mxu0 0
    %654 = vmatpush.bf16.msra.mxu0 0
    %655 = vmatpush.bf16.msra.mxu0 %v646
    %656 = vmatpush.bf16.msra.mxu0 %v645
    %657 = vmatmul.bf16.gmra.mxu0 %v101
    %v658 = vpop.f32.mrf.mxu0
    %v659 = vadd.f32 %v635, %v658
    %v660 = vpop.f32.mrf.mxu0
    %661 = vdwg.mxu0
    %s662 = scalar_lea.vmem %s7, 48
    %v663 = vld [vmem:[%s662] sm:$0xf]
    %v664 = vld [vmem:[%s662 + $0x4] sm:$0xf]
    %v665 = vld [vmem:[%s662 + $0x8] sm:$0xf]
    %v666 = vld [vmem:[%s662 + $0xc] sm:$0xf]
    %s667 = scalar_lea.vmem %s8, 3
    %v668 = vld [vmem:[%s667] sm:$0x1]
    %v670 = vperm.slane %v668, 0
    %v676 = vunpack.c.l.b16 %v663
    %v677 = vunpack.c.l.b16 %v664
    %v678 = vunpack.c.l.b16 %v665
    %v679 = vunpack.c.l.b16 %v666
    %v680 = vpack.c.b16 %v677, %v676
    %v681 = vpack.c.b16 %v679, %v678
    %684 = vmatpush.bf16.msra.mxu0 0
    %685 = vmatpush.bf16.msra.mxu0 0
    %686 = vmatpush.bf16.msra.mxu0 0
    %687 = vmatpush.bf16.msra.mxu0 0
    %688 = vmatpush.bf16.msra.mxu0 0
    %689 = vmatpush.bf16.msra.mxu0 0
    %690 = vmatpush.bf16.msra.mxu0 %v681
    %691 = vmatpush.bf16.msra.mxu0 %v680
    %692 = vmatmul.bf16.gmra.mxu0 %v137
    %v693 = vpop.f32.mrf.mxu0
    %v694 = vadd.f32 %v670, %v693
    %v695 = vpop.f32.mrf.mxu0
    %696 = vdwg.mxu0
    %v697 = vpack.c.bf16 %v624, %v624
    %v698 = vpack.c.bf16 %v659, %v659
    %v700 = vsel %vm154, %v697, 0
    %v703 = vsel %vm154, %v698, 0
    %705 = vmatpush.bf16.xpose.msra.mxu0 0
    %706 = vmatpush.bf16.xpose.msra.mxu0 0
    %707 = vmatpush.bf16.xpose.msra.mxu0 0
    %708 = vmatpush.bf16.xpose.msra.mxu0 0
    %709 = vmatpush.bf16.xpose.msra.mxu0 0
    %710 = vmatpush.bf16.xpose.msra.mxu0 0
    %711 = vmatpush.bf16.xpose.msra.mxu0 0
    %712 = vmatpush.bf16.xpose.msra.mxu0 %v703
    %713 = vmatmul.bf16.gmra.mxu0 %v700
    %v714 = vpop.f32.mrf.mxu0
    %v715 = vadd.f32 0.0, %v714
    %v716 = vpop.f32.mrf.mxu0
    %717 = vdwg.mxu0
    %v718 = vmul.f32 %v715, 0.35355338
    %v719 = vsel %vm154, %v718, -inf
    %720 = vmax.xlane.f32.xlu0 %v719
    %v721 = vpop.xlane.xlu0 %720
    %v722 = vsub.f32 %v718, %v721
    %v723 = vmul.f32 %v722, 1.442695
    %v724 = vpow.pop %v723
    %v725 = vsel %vm154, %v724, 0.0
    %726 = vadd.xlane.f32.xlu0 %v725
    %v727 = vpop.xlane.xlu0 %726
    %v728 = vrcp.pop %v727
    %v729 = vmul.f32 %v724, %v728
    %v730 = vpack.c.bf16 %v729, %v729
    %v731 = vpack.c.bf16 %v694, %v694
    %v733 = vsel %vm154, %v730, 0
    %v736 = vsel %vm191, %v731, 0
    %738 = vmatpush.bf16.msra.mxu0 0
    %739 = vmatpush.bf16.msra.mxu0 0
    %740 = vmatpush.bf16.msra.mxu0 0
    %741 = vmatpush.bf16.msra.mxu0 0
    %742 = vmatpush.bf16.msra.mxu0 0
    %743 = vmatpush.bf16.msra.mxu0 0
    %744 = vmatpush.bf16.msra.mxu0 0
    %745 = vmatpush.bf16.msra.mxu0 %v736
    %746 = vmatmul.bf16.gmra.mxu0 %v733
    %v747 = vpop.f32.mrf.mxu0
    %v748 = vadd.f32 0.0, %v747
    %v749 = vpop.f32.mrf.mxu0
    %750 = vdwg.mxu0
    %v751 = vpack.c.bf16 %v748, %v748
    %s752 = scalar_lea.vmem %s9, 12
    %v753 = vld [vmem:[%s752] sm:$0xf]
    %v755 = vsel %vm154, %v751, 0
    %v758 = vsel %vm191, %v753, 0
    %760 = vmatpush.bf16.msra.mxu0 0
    %761 = vmatpush.bf16.msra.mxu0 0
    %762 = vmatpush.bf16.msra.mxu0 0
    %763 = vmatpush.bf16.msra.mxu0 0
    %764 = vmatpush.bf16.msra.mxu0 0
    %765 = vmatpush.bf16.msra.mxu0 0
    %766 = vmatpush.bf16.msra.mxu0 0
    %767 = vmatpush.bf16.msra.mxu0 %v758
    %768 = vmatmul.bf16.gmra.mxu0 %v755
    %v769 = vpop.f32.mrf.mxu0
    %v770 = vadd.f32 0.0, %v769
    %v771 = vpop.f32.mrf.mxu0
    %772 = vdwg.mxu0
    %v773 = vadd.f32 %v591, %v770
    %v774 = vld [vmem:[%s10] sm:$0x1]
    %v776 = vperm.slane %v774, 0
    %v778 = vadd.f32 %v773, %v776
    %779 = vst.msk [vmem:[#allocation2] sm:$0xff] %vm63, %v778
    // Predicated region
    $region46: #{tpu_custom_call.1} parent=1 // pred_check
      _
    $region47: #{tpu_custom_call.1} parent=1 // pred_check_branch
      %781 = sbr.rel (0) target = $region49
    $region48: #{tpu_custom_call.1} parent=1 // pred_region
      %783 = vsyncadd [#allocation3], 0
      %s785 = sshll.u32 [#allocation2], 4
      %s786 = int_to_ptr.vmem [resolvable:$true] %s785
      %s787 = sshll.u32 %s11, 4
      %s788 = int_to_ptr.hbm [resolvable:$true] %s787
      %790 = dma.vmem_to_hbm [thread:$0]  %s786, 128, %s788, [#allocation3]
    $region49: #{tpu_custom_call.1} parent=1 // pred_fallthru
      _
    // Predicated region
    $region50: #{tpu_custom_call.1} parent=1 // pred_check
      _
    $region51: #{tpu_custom_call.1} parent=1 // pred_check_branch
      %792 = sbr.rel (0) target = $region53
    $region52: #{tpu_custom_call.1} parent=1 // pred_region
      %794 = dma.done [#allocation3], 128
    $region53: #{tpu_custom_call.1} parent=1 // pred_fallthru
      _
    %795 = vsyncpa [#allocation3], 1

</llo_original>
